<compile_context>
chip_gen: v7x
topology: tpu7x:2x2x1
jax: 0.10.0
libtpu: 0.0.40
codegen_flags: <defaults>
</compile_context>

<pallas_src>
import functools

import jax
import jax.numpy as jnp
from jax.experimental import pallas as pl
from jax.experimental.pallas import tpu as pltpu

D = 3  # spatial dimension of the equivariant vectors


def _round_up(x, m):
    return ((x + m - 1) // m) * m


# ---------------------------------------------------------------------------
# Pallas kernel: full length-L recurrence for one block of R*N rows
# ---------------------------------------------------------------------------
def _rye_recurrence_kernel(x_ref, h0_ref, w_static_ref, bias_ref, w_rec_ref,
                           traj_ref, feat_sc, *, hidden, dc):
    """Refs (per grid step / row block):
      x_ref      [L, rows, H+1+3]  packed input: [inv_in | mean(dx^2) | dx]
      h0_ref     [rows, P]         packed initial state [inv | eq | zeros]
      w_static   [H+4, WIDE+DC]    -> [pre_static | disp_exp] for all L steps
      bias       [1,   WIDE+DC]    (zeros over the disp_exp columns)
      w_rec      [P,   WIDE+DC]    rows: [inv | eq | eq^2 | zero pad]
      traj_ref   [L, rows, P]      packed per-step state (lane-dense stores)
      feat_sc    [rows, P] f32     persistent state / matmul-LHS scratch
    """
    length, rows, fin = x_ref.shape
    wide = hidden + 2 * dc  # invariant block + gate_h block + gate_x block

    # (1) Every input-dependent term for all L steps in ONE fused matmul:
    #     cols [:wide]  = inv_in @ W_inv_e + mean(dx^2) * W_enn_e  (+ bias)
    #     cols [wide:]  = dx expanded d-major to D*C lanes (kron(I_3, 1^T))
    x = x_ref[...].reshape(length * rows, fin)
    ps = (jnp.dot(x, w_static_ref[...], preferred_element_type=jnp.float32)
          + bias_ref[...].astype(jnp.float32)
          ).reshape(length, rows, wide + dc)

    # (2) Persistent packed state scratch, lane-padded to P = 128:
    #     [inv_hid (H) | eq_hid (DC) | eq_hid^2 (DC) | zeros].
    feat_sc[...] = h0_ref[...]
    w_rec = w_rec_ref[...]

    # L is small and static -> unrolled; state stays in the VMEM scratch.
    # TODO(synk): at production L switch to lax.fori_loop and keep `ps` in a
    # VMEM scratch (bounds live ranges / vreg pressure).
    for l in range(length):
        eq_hid = feat_sc[:, hidden:hidden + dc]                     # f32
        feat_sc[:, hidden + dc:hidden + 2 * dc] = eq_hid * eq_hid   # f32 square

        # (3) ONE matmul per step: cols [:wide] are the recurrent
        #     pre-activation terms, cols [wide:] are the kron(I_3, M)
        #     channel-mixed equivariant state.
        rec = jnp.dot(feat_sc[...].astype(w_rec.dtype), w_rec,
                      preferred_element_type=jnp.float32)

        stat = ps[l]
        pre = rec[:, :wide] + stat[:, :wide]
        mixed = rec[:, wide:]
        dx_e = stat[:, wide:]

        inv_new = jnp.tanh(pre[:, :hidden])
        gate_h = jax.nn.sigmoid(pre[:, hidden:hidden + dc])
        gate_x = jnp.tanh(pre[:, hidden + dc:])        # bounded (NaN fix)
        eq_new = gate_h * mixed + gate_x * dx_e

        feat_sc[:, :hidden] = inv_new
        feat_sc[:, hidden:hidden + dc] = eq_new
        # (4) Full lane-dense [rows, 128] store (no masked 44-lane vst);
        #     the wrapper slices the useful lanes afterwards.
        traj_ref[l] = feat_sc[...]


def rye_recurrence_pallas(x_packed, h0_packed, w_static, bias, w_rec, *,
                          hidden, num_channels, row_block=None):
    length, rows, fin = x_packed.shape
    p = h0_packed.shape[-1]
    dc = D * num_channels
    if row_block is None:
        row_block = rows
    assert rows % row_block == 0 and row_block % 8 == 0

    kernel = functools.partial(_rye_recurrence_kernel, hidden=hidden, dc=dc)
    return pl.pallas_call(
        kernel,
        out_shape=jax.ShapeDtypeStruct((length, rows, p), jnp.float32),
        grid=(rows // row_block,),
        in_specs=[
            pl.BlockSpec((length, row_block, fin), lambda i: (0, i, 0)),
            pl.BlockSpec((row_block, p), lambda i: (i, 0)),
            pl.BlockSpec(w_static.shape, lambda i: (0, 0)),
            pl.BlockSpec(bias.shape, lambda i: (0, 0)),
            pl.BlockSpec(w_rec.shape, lambda i: (0, 0)),
        ],
        out_specs=pl.BlockSpec((length, row_block, p), lambda i: (0, i, 0)),
        scratch_shapes=[pltpu.VMEM((row_block, p), jnp.float32)],
        # Row blocks are independent.  TODO(synk): on v7x mark this axis
        # pltpu.CORE_PARALLEL (2 TCs/chip); kept "parallel" so the same code
        # compiles on single-TC v5e/v6e.
        compiler_params=pltpu.CompilerParams(
            dimension_semantics=("parallel",)),
    )(x_packed, h0_packed, w_static, bias, w_rec)


# ---------------------------------------------------------------------------
# Wrapper-side weight fusion / padding (done once, plain XLA)
# ---------------------------------------------------------------------------
def _expand_gate_cols(w, hidden, c):
    """[K, h+2c] -> [K, h+2*D*c]: replicate gate_h / gate_x column blocks D
    times so gates align with the d-major packed [*, D*C] equivariant state."""
    return jnp.concatenate(
        [w[:, :hidden],
         jnp.tile(w[:, hidden:hidden + c], (1, D)),
         jnp.tile(w[:, hidden + c:hidden + 2 * c], (1, D))], axis=-1)


def expand_rye_params(params, p):
    hidden = params["W_hid"].shape[0]
    c = params["M"].shape[0]
    dc = D * c
    wide = hidden + 2 * dc
    f32 = jnp.float32

    w_inv_e = _expand_gate_cols(params["W_inv"], hidden, c)          # [H,  wide]
    w_enn_e = _expand_gate_cols(params["W_enn"], hidden, c)          # [1,  wide]
    w_hid_e = _expand_gate_cols(params["W_hid"], hidden, c)          # [H,  wide]
    # mean over d of eq_hid^2  ==  (d-major packed eq_hid^2) @ (tiled W_eqn / D)
    w_eqn_e = jnp.tile(_expand_gate_cols(params["W_eqn"], hidden, c),
                       (D, 1)) / D                                   # [DC, wide]
    m_blk = jnp.kron(jnp.eye(D, dtype=f32), params["M"])             # [DC, DC]
    dx_expand = jnp.kron(jnp.eye(D, dtype=f32),
                         jnp.ones((1, c), f32))                      # [3,  DC]

    # rows [inv_in | mean(dx^2) | dx], cols [pre_static | disp_exp]
    w_static = jnp.block([
        [w_inv_e, jnp.zeros((hidden, dc), f32)],
        [w_enn_e, jnp.zeros((1, dc), f32)],
        [jnp.zeros((D, wide), f32), dx_expand],
    ])                                                               # [H+4, wide+DC]

    bias = jnp.concatenate(
        [_expand_gate_cols(params["bias"], hidden, c),
         jnp.zeros((1, dc), f32)], axis=-1)                          # [1, wide+DC]

    # rows [inv_hid | eq_hid | eq_hid^2 | zero pad], cols [pre_rec | mixed]
    w_rec = jnp.block([
        [w_hid_e, jnp.zeros((hidden, dc), f32)],
        [jnp.zeros((dc, wide), f32), m_blk],
        [w_eqn_e, jnp.zeros((dc, dc), f32)],
    ])                                                               # [H+2DC, wide+DC]
    w_rec = jnp.concatenate(
        [w_rec, jnp.zeros((p - w_rec.shape[0], wide + dc), f32)], axis=0)

    return {"W_static": w_static, "bias": bias, "W_rec": w_rec}


# ---------------------------------------------------------------------------
# Plain-JAX glue: random walks + pure-JAX reference recurrence
# ---------------------------------------------------------------------------
def generate_walk(key, prob, length):
    """Stand-in random walk. prob: [R,N,N] row-stochastic. Returns int32 walks
    [R,L,N] with walks[r,0,n]==n, walks[r,t,n] ~ Cat(prob[r, walks[r,t-1,n],:]).
    TODO(synk): reference generate_walk is not defined in the PyTorch code."""
    rr, n, _ = prob.shape
    start = jnp.broadcast_to(jnp.arange(n, dtype=jnp.int32), (rr, n))
    logp = jnp.log(prob + 1e-9)

    def step(cur, k):
        logits = jnp.take_along_axis(logp, cur[:, :, None].astype(jnp.int32),
                                     axis=1)
        nxt = jax.random.categorical(k, logits, axis=-1).astype(jnp.int32)
        return nxt, nxt

    keys = jax.random.split(key, length - 1)
    _, rest = jax.lax.scan(step, start, keys)              # [L-1, R, N]
    walks = jnp.concatenate([start[None], rest], axis=0)   # [L, R, N]
    return jnp.moveaxis(walks, 0, 1)                       # [R, L, N]


def rye_layer_ref(inv_in, eq_in, inv_hid, eq_hid, params):
    """Stand-in E(3)-equivariant recurrent cell (RyeLayer not given in the
    reference): invariant tanh update + gated channel-mixed equivariant update
    with bounded gates.  TODO(synk): replace with the real RyeLayer."""
    hp = jax.lax.Precision.HIGHEST
    hidden = params["W_hid"].shape[0]
    c = params["M"].shape[0]
    eq_norm = jnp.mean(eq_hid ** 2, axis=-2)                       # [R,N,C]
    eq_in_norm = jnp.mean(eq_in ** 2, axis=-1, keepdims=True)      # [R,N,1]
    pre = (jnp.dot(inv_in, params["W_inv"], precision=hp)
           + jnp.dot(inv_hid, params["W_hid"], precision=hp)
           + jnp.dot(eq_norm, params["W_eqn"], precision=hp)
           + eq_in_norm * params["W_enn"] + params["bias"])
    mixed = jnp.einsum("rndc,ce->rnde", eq_hid, params["M"], precision=hp)
    inv_new = jnp.tanh(pre[..., :hidden])
    gate_h = jax.nn.sigmoid(pre[..., hidden:hidden + c])
    gate_x = jnp.tanh(pre[..., hidden + c:])
    eq_new = (gate_h[..., None, :] * mixed
              + gate_x[..., None, :] * eq_in[..., :, None])
    return inv_new, eq_new


def rye_recurrence_ref(inv_seq, disp, inv_h0, eq_h0, params):
    inv_hid, eq_hid = inv_h0, eq_h0
    inv_traj, eq_traj = [], []
    for idx in range(inv_seq.shape[1]):
        inv_hid, eq_hid = rye_layer_ref(inv_seq[:, idx], disp[:, idx],
                                        inv_hid, eq_hid, params)
        inv_traj.append(inv_hid)
        eq_traj.append(eq_hid)
    return jnp.stack(inv_traj, axis=1), jnp.stack(eq_traj, axis=1)


# ---------------------------------------------------------------------------
# Full model forward
# ---------------------------------------------------------------------------
def rye_model_forward(params, probability, invariant_input, equivariant_input,
                      *, length, repeat, walk_key,
                      invariant_hidden=None, equivariant_hidden=None,
                      use_pallas=True, compute_dtype=jnp.bfloat16,
                      row_block=None):
    # depth == 1 (module default).
    # TODO(synk): depth > 1 (mean trajectory fed back as next input) is
    # plain-JAX glue around the same kernel and is not wired up here.
    n = invariant_input.shape[0]
    hidden = params["W_hid"].shape[0]
    c = params["M"].shape[0]
    dc = D * c

    # fc_in stays in XLA: an [N,16]x[16,32] matmul as a kernel is pure overhead.
    inv_fc = invariant_input @ params["Wfc"] + params["bfc"]          # [N, H]

    prob_r = jnp.broadcast_to(probability[None],
                              (repeat,) + probability.shape)          # [R, N, N]
    walks = generate_walk(walk_key, prob_r, length)                   # [R, L, N]
    walks = jnp.flip(walks, axis=-2)                                  # .flip(-2)

    inv_seq = inv_fc[walks]                                           # [R,L,N,H]
    eq_seq = equivariant_input[walks]                                 # [R,L,N,3]
    disp = jnp.concatenate(
        [jnp.zeros_like(eq_seq[:, :1]), eq_seq[:, 1:] - eq_seq[:, :-1]], axis=1)

    if invariant_hidden is None:
        invariant_hidden = jnp.zeros((n, hidden), jnp.float32)
    if equivariant_hidden is None:
        equivariant_hidden = jnp.zeros((n, D, c), jnp.float32)
    inv_h0 = jnp.broadcast_to(invariant_hidden[None], (repeat, n, hidden))
    eq_h0 = jnp.broadcast_to(equivariant_hidden[None], (repeat, n, D, c))

    if not use_pallas:
        return rye_recurrence_ref(inv_seq, disp, inv_h0, eq_h0, params)

    # ---- pack for the kernel: fold repeat into the row axis (rows = R*N) ----
    rows = repeat * n
    rows_pad = _round_up(max(rows, 8), 8)
    p = _round_up(hidden + 2 * dc, 128)            # lane-padded state width

    dx_norm = jnp.mean(disp ** 2, axis=-1, keepdims=True)             # [R,L,N,1]
    x = jnp.concatenate([inv_seq, dx_norm, disp], axis=-1)            # [R,L,N,H+4]
    x = jnp.moveaxis(x, 0, 1).reshape(length, rows, hidden + 1 + D)   # [L,RN,H+4]
    h0 = jnp.concatenate([jnp.reshape(inv_h0, (rows, hidden)),
                          jnp.reshape(eq_h0, (rows, dc))], axis=-1)   # [RN,H+DC]
    if rows_pad != rows:
        x = jnp.pad(x, ((0, 0), (0, rows_pad - rows), (0, 0)))
        h0 = jnp.pad(h0, ((0, rows_pad - rows), (0, 0)))
    h0 = jnp.pad(h0, ((0, 0), (0, p - (hidden + dc)))).astype(jnp.float32)

    ep = expand_rye_params(params, p)
    traj = rye_recurrence_pallas(
        x.astype(compute_dtype), h0,
        ep["W_static"].astype(compute_dtype),
        ep["bias"].astype(jnp.float32),
        ep["W_rec"].astype(compute_dtype),
        hidden=hidden, num_channels=c, row_block=row_block)           # [L,RNp,P]

    traj = traj[:, :rows]
    traj = jnp.moveaxis(traj.reshape(length, repeat, n, p), 1, 0)     # [R,L,N,P]
    inv_traj = traj[..., :hidden]                                     # [R,L,N,H]
    eq_traj = traj[..., hidden:hidden + dc].reshape(repeat, length, n, D, c)
    return inv_traj, eq_traj


def init_params(key, input_size, hidden_size, num_channels):
    h, c = hidden_size, num_channels
    wide = h + 2 * c
    ks = jax.random.split(key, 8)

    def w(k, shape, fan_in, scale=0.4):
        return (scale / jnp.sqrt(fan_in)) * jax.random.normal(k, shape, jnp.float32)

    return {
        "Wfc": w(ks[0], (input_size, h), input_size),
        "bfc": 0.1 * jax.random.normal(ks[1], (1, h), jnp.float32),
        "W_inv": w(ks[2], (h, wide), h),
        "W_hid": w(ks[3], (h, wide), h),
        "W_eqn": w(ks[4], (c, wide), c, scale=0.3),
        "W_enn": w(ks[5], (1, wide), 1, scale=0.05),
        "bias": 0.1 * jax.random.normal(ks[6], (1, wide), jnp.float32),
        "M": w(ks[7], (c, c), c, scale=0.3),
    }


if __name__ == "__main__":
    key = jax.random.PRNGKey(0)
    k_param, k_prob, k_inv, k_eq, k_walk = jax.random.split(key, 5)

    input_size, hidden_size, num_channels = 16, 32, 4
    n_nodes, length, repeat = 8, 8, 2

    params = init_params(k_param, input_size, hidden_size, num_channels)

    raw = jax.random.uniform(k_prob, (n_nodes, n_nodes), jnp.float32, 0.05, 1.0)
    probability = raw / jnp.sum(raw, axis=-1, keepdims=True)          # [N, N]
    invariant_input = jax.random.normal(k_inv, (n_nodes, input_size), jnp.float32)
    equivariant_input = jax.random.normal(k_eq, (n_nodes, D), jnp.float32)

    inv_traj, eq_traj = rye_model_forward(
        params, probability, invariant_input, equivariant_input,
        length=length, repeat=repeat, walk_key=k_walk, use_pallas=True)
    jax.block_until_ready((inv_traj, eq_traj))

    # Pure-JAX reference (same walks, un-fused f32 HIGHEST-precision math).
    inv_ref, eq_ref = rye_model_forward(
        params, probability, invariant_input, equivariant_input,
        length=length, repeat=repeat, walk_key=k_walk, use_pallas=False)

    assert inv_traj.shape == (repeat, length, n_nodes, hidden_size)
    assert eq_traj.shape == (repeat, length, n_nodes, D, num_channels)
    assert bool(jnp.all(jnp.isfinite(inv_traj))), "NaN/inf in invariant traj"
    assert bool(jnp.all(jnp.isfinite(eq_traj))), "NaN/inf in equivariant traj"

    max_inv = float(jnp.max(jnp.abs(inv_traj - inv_ref)))
    max_eq = float(jnp.max(jnp.abs(eq_traj - eq_ref)))
    # bf16 MXU operands with f32 accumulation vs an f32 reference; the bounded
    # recurrence keeps the error well inside these tolerances (an f32 kernel
    # path matches to ~1e-5 -- packing algebra is exact).
    assert jnp.allclose(inv_traj, inv_ref, atol=1e-1, rtol=1e-1), (
        "invariant trajectory mismatch: max |diff| = %g" % max_inv)
    assert jnp.allclose(eq_traj, eq_ref, atol=1e-1, rtol=1e-1), (
        "equivariant trajectory mismatch: max |diff| = %g" % max_eq)
    print("KERNEL_OK")
</pallas_src>

<mosaic_0001>
module attributes {stable_mosaic.version = 11 : i64} {
  func.func @_rye_recurrence_kernel(%arg0: i32, %arg1: memref<8x16x36xbf16, #tpu.memory_space<vmem>>, %arg2: memref<16x128xf32, #tpu.memory_space<vmem>>, %arg3: memref<36x68xbf16, #tpu.memory_space<vmem>>, %arg4: memref<1x68xf32, #tpu.memory_space<vmem>>, %arg5: memref<128x68xbf16, #tpu.memory_space<vmem>>, %arg6: memref<8x16x128xf32, #tpu.memory_space<vmem>>, %arg7: memref<16x128xf32, #tpu.memory_space<vmem>>) attributes {dimension_semantics = [#tpu.dimension_semantics<parallel>], iteration_bounds = array<i64: 1>, scalar_prefetch = 0 : i64, scratch_operands = 1 : i64, tpu.core_type = #tpu.core_type<tc>, window_params = [{transform_indices = @transform_0, window_bounds = array<i64: 8, 16, 36>}, {transform_indices = @transform_1, window_bounds = array<i64: 16, 128>}, {pipeline_mode = #tpu.pipeline_mode<synchronous>, transform_indices = @transform_2, window_bounds = array<i64: 36, 68>}, {pipeline_mode = #tpu.pipeline_mode<synchronous>, transform_indices = @transform_3, window_bounds = array<i64: 1, 68>}, {pipeline_mode = #tpu.pipeline_mode<synchronous>, transform_indices = @transform_4, window_bounds = array<i64: 128, 68>}, {transform_indices = @transform_5, window_bounds = array<i64: 8, 16, 128>}]} {
    %c0 = arith.constant 0 : index
    %c0_0 = arith.constant 0 : index
    %c0_1 = arith.constant 0 : index
    %0 = vector.load %arg1[%c0, %c0_0, %c0_1] : memref<8x16x36xbf16, #tpu.memory_space<vmem>>, vector<8x16x36xbf16>
    %1 = vector.shape_cast %0 : vector<8x16x36xbf16> to vector<128x36xbf16>
    %c0_2 = arith.constant 0 : index
    %c0_3 = arith.constant 0 : index
    %2 = vector.load %arg3[%c0_2, %c0_3] : memref<36x68xbf16, #tpu.memory_space<vmem>>, vector<36x68xbf16>
    %cst = arith.constant dense<0.000000e+00> : vector<128x68xf32>
    %3 = tpu.matmul %1, %2, %cst {dimension_numbers = #tpu.dot_dimension_numbers<[1], [0], [0], [1], [0, 0, 1, 1], [], []>} : vector<128x36xbf16>, vector<36x68xbf16>, vector<128x68xf32> -> vector<128x68xf32>
    %c0_4 = arith.constant 0 : index
    %c0_5 = arith.constant 0 : index
    %4 = vector.load %arg4[%c0_4, %c0_5] : memref<1x68xf32, #tpu.memory_space<vmem>>, vector<1x68xf32>
    %5 = vector.broadcast %4 : vector<1x68xf32> to vector<128x68xf32>
    %6 = arith.addf %3, %5 : vector<128x68xf32>
    %7 = vector.shape_cast %6 : vector<128x68xf32> to vector<8x16x68xf32>
    %c0_6 = arith.constant 0 : index
    %c0_7 = arith.constant 0 : index
    %8 = vector.load %arg2[%c0_6, %c0_7] : memref<16x128xf32, #tpu.memory_space<vmem>>, vector<16x128xf32>
    %c0_8 = arith.constant 0 : index
    %c0_9 = arith.constant 0 : index
    %9 = vector.load %arg7[%c0_8, %c0_9] : memref<16x128xf32, #tpu.memory_space<vmem>>, vector<16x128xf32>
    tpu.vector_store %arg7[%c0_8, %c0_9], %8 {strides = array<i32>} : memref<16x128xf32, #tpu.memory_space<vmem>>, vector<16x128xf32>,
    %c0_10 = arith.constant 0 : index
    %c0_11 = arith.constant 0 : index
    %10 = vector.load %arg5[%c0_10, %c0_11] : memref<128x68xbf16, #tpu.memory_space<vmem>>, vector<128x68xbf16>
    %c0_12 = arith.constant 0 : index
    %c32 = arith.constant 32 : index
    %11 = vector.load %arg7[%c0_12, %c32] : memref<16x128xf32, #tpu.memory_space<vmem>>, vector<16x12xf32>
    %12 = arith.mulf %11, %11 : vector<16x12xf32>
    %c0_13 = arith.constant 0 : index
    %c44 = arith.constant 44 : index
    %13 = vector.load %arg7[%c0_13, %c44] : memref<16x128xf32, #tpu.memory_space<vmem>>, vector<16x12xf32>
    tpu.vector_store %arg7[%c0_13, %c44], %12 {strides = array<i32>} : memref<16x128xf32, #tpu.memory_space<vmem>>, vector<16x12xf32>,
    %c0_14 = arith.constant 0 : index
    %c0_15 = arith.constant 0 : index
    %14 = vector.load %arg7[%c0_14, %c0_15] : memref<16x128xf32, #tpu.memory_space<vmem>>, vector<16x128xf32>
    %15 = arith.truncf %14 : vector<16x128xf32> to vector<16x128xbf16>
    %cst_16 = arith.constant dense<0.000000e+00> : vector<16x68xf32>
    %16 = tpu.matmul %15, %10, %cst_16 {dimension_numbers = #tpu.dot_dimension_numbers<[1], [0], [0], [1], [0, 0, 1, 1], [], []>} : vector<16x128xbf16>, vector<128x68xbf16>, vector<16x68xf32> -> vector<16x68xf32>
    %17 = vector.extract_strided_slice %7 {offsets = [0, 0, 0], sizes = [1, 16, 68], strides = [1, 1, 1]} : vector<8x16x68xf32> to vector<1x16x68xf32>
    %18 = vector.shape_cast %17 : vector<1x16x68xf32> to vector<16x68xf32>
    %19 = vector.extract_strided_slice %16 {offsets = [0, 0], sizes = [16, 56], strides = [1, 1]} : vector<16x68xf32> to vector<16x56xf32>
    %20 = vector.extract_strided_slice %18 {offsets = [0, 0], sizes = [16, 56], strides = [1, 1]} : vector<16x68xf32> to vector<16x56xf32>
    %21 = arith.addf %19, %20 : vector<16x56xf32>
    %22 = vector.extract_strided_slice %16 {offsets = [0, 56], sizes = [16, 12], strides = [1, 1]} : vector<16x68xf32> to vector<16x12xf32>
    %23 = vector.extract_strided_slice %18 {offsets = [0, 56], sizes = [16, 12], strides = [1, 1]} : vector<16x68xf32> to vector<16x12xf32>
    %24 = vector.extract_strided_slice %21 {offsets = [0, 0], sizes = [16, 32], strides = [1, 1]} : vector<16x56xf32> to vector<16x32xf32>
    %25 = math.tanh %24 : vector<16x32xf32>
    %26 = vector.extract_strided_slice %21 {offsets = [0, 32], sizes = [16, 12], strides = [1, 1]} : vector<16x56xf32> to vector<16x12xf32>
    %27 = arith.negf %26 : vector<16x12xf32>
    %28 = math.exp %27 : vector<16x12xf32>
    %cst_17 = arith.constant 1.000000e+00 : f32
    %29 = vector.broadcast %cst_17 : f32 to vector<16x12xf32>
    %30 = arith.addf %29, %28 : vector<16x12xf32>
    %31 = arith.divf %29, %30 : vector<16x12xf32>
    %32 = vector.extract_strided_slice %21 {offsets = [0, 44], sizes = [16, 12], strides = [1, 1]} : vector<16x56xf32> to vector<16x12xf32>
    %33 = math.tanh %32 : vector<16x12xf32>
    %34 = arith.mulf %31, %22 : vector<16x12xf32>
    %35 = arith.mulf %33, %23 : vector<16x12xf32>
    %36 = arith.addf %34, %35 : vector<16x12xf32>
    %c0_18 = arith.constant 0 : index
    %c0_19 = arith.constant 0 : index
    %37 = vector.load %arg7[%c0_18, %c0_19] : memref<16x128xf32, #tpu.memory_space<vmem>>, vector<16x32xf32>
    tpu.vector_store %arg7[%c0_18, %c0_19], %25 {strides = array<i32>} : memref<16x128xf32, #tpu.memory_space<vmem>>, vector<16x32xf32>,
    %c0_20 = arith.constant 0 : index
    %c32_21 = arith.constant 32 : index
    %38 = vector.load %arg7[%c0_20, %c32_21] : memref<16x128xf32, #tpu.memory_space<vmem>>, vector<16x12xf32>
    tpu.vector_store %arg7[%c0_20, %c32_21], %36 {strides = array<i32>} : memref<16x128xf32, #tpu.memory_space<vmem>>, vector<16x12xf32>,
    %c0_22 = arith.constant 0 : index
    %c0_23 = arith.constant 0 : index
    %39 = vector.load %arg7[%c0_22, %c0_23] : memref<16x128xf32, #tpu.memory_space<vmem>>, vector<16x128xf32>
    %c0_24 = arith.constant 0 : index
    %c0_25 = arith.constant 0 : index
    %c0_26 = arith.constant 0 : index
    %40 = vector.load %arg6[%c0_24, %c0_25, %c0_26] : memref<8x16x128xf32, #tpu.memory_space<vmem>>, vector<1x16x128xf32>
    %41 = vector.shape_cast %40 : vector<1x16x128xf32> to vector<16x128xf32>
    %42 = vector.shape_cast %39 : vector<16x128xf32> to vector<1x16x128xf32>
    tpu.vector_store %arg6[%c0_24, %c0_25, %c0_26], %42 {strides = array<i32>} : memref<8x16x128xf32, #tpu.memory_space<vmem>>, vector<1x16x128xf32>,
    %c0_27 = arith.constant 0 : index
    %c32_28 = arith.constant 32 : index
    %43 = vector.load %arg7[%c0_27, %c32_28] : memref<16x128xf32, #tpu.memory_space<vmem>>, vector<16x12xf32>
    %44 = arith.mulf %43, %43 : vector<16x12xf32>
    %c0_29 = arith.constant 0 : index
    %c44_30 = arith.constant 44 : index
    %45 = vector.load %arg7[%c0_29, %c44_30] : memref<16x128xf32, #tpu.memory_space<vmem>>, vector<16x12xf32>
    tpu.vector_store %arg7[%c0_29, %c44_30], %44 {strides = array<i32>} : memref<16x128xf32, #tpu.memory_space<vmem>>, vector<16x12xf32>,
    %c0_31 = arith.constant 0 : index
    %c0_32 = arith.constant 0 : index
    %46 = vector.load %arg7[%c0_31, %c0_32] : memref<16x128xf32, #tpu.memory_space<vmem>>, vector<16x128xf32>
    %47 = arith.truncf %46 : vector<16x128xf32> to vector<16x128xbf16>
    %cst_33 = arith.constant dense<0.000000e+00> : vector<16x68xf32>
    %48 = tpu.matmul %47, %10, %cst_33 {dimension_numbers = #tpu.dot_dimension_numbers<[1], [0], [0], [1], [0, 0, 1, 1], [], []>} : vector<16x128xbf16>, vector<128x68xbf16>, vector<16x68xf32> -> vector<16x68xf32>
    %49 = vector.extract_strided_slice %7 {offsets = [1, 0, 0], sizes = [1, 16, 68], strides = [1, 1, 1]} : vector<8x16x68xf32> to vector<1x16x68xf32>
    %50 = vector.shape_cast %49 : vector<1x16x68xf32> to vector<16x68xf32>
    %51 = vector.extract_strided_slice %48 {offsets = [0, 0], sizes = [16, 56], strides = [1, 1]} : vector<16x68xf32> to vector<16x56xf32>
    %52 = vector.extract_strided_slice %50 {offsets = [0, 0], sizes = [16, 56], strides = [1, 1]} : vector<16x68xf32> to vector<16x56xf32>
    %53 = arith.addf %51, %52 : vector<16x56xf32>
    %54 = vector.extract_strided_slice %48 {offsets = [0, 56], sizes = [16, 12], strides = [1, 1]} : vector<16x68xf32> to vector<16x12xf32>
    %55 = vector.extract_strided_slice %50 {offsets = [0, 56], sizes = [16, 12], strides = [1, 1]} : vector<16x68xf32> to vector<16x12xf32>
    %56 = vector.extract_strided_slice %53 {offsets = [0, 0], sizes = [16, 32], strides = [1, 1]} : vector<16x56xf32> to vector<16x32xf32>
    %57 = math.tanh %56 : vector<16x32xf32>
    %58 = vector.extract_strided_slice %53 {offsets = [0, 32], sizes = [16, 12], strides = [1, 1]} : vector<16x56xf32> to vector<16x12xf32>
    %59 = arith.negf %58 : vector<16x12xf32>
    %60 = math.exp %59 : vector<16x12xf32>
    %cst_34 = arith.constant 1.000000e+00 : f32
    %61 = vector.broadcast %cst_34 : f32 to vector<16x12xf32>
    %62 = arith.addf %61, %60 : vector<16x12xf32>
    %63 = arith.divf %61, %62 : vector<16x12xf32>
    %64 = vector.extract_strided_slice %53 {offsets = [0, 44], sizes = [16, 12], strides = [1, 1]} : vector<16x56xf32> to vector<16x12xf32>
    %65 = math.tanh %64 : vector<16x12xf32>
    %66 = arith.mulf %63, %54 : vector<16x12xf32>
    %67 = arith.mulf %65, %55 : vector<16x12xf32>
    %68 = arith.addf %66, %67 : vector<16x12xf32>
    %c0_35 = arith.constant 0 : index
    %c0_36 = arith.constant 0 : index
    %69 = vector.load %arg7[%c0_35, %c0_36] : memref<16x128xf32, #tpu.memory_space<vmem>>, vector<16x32xf32>
    tpu.vector_store %arg7[%c0_35, %c0_36], %57 {strides = array<i32>} : memref<16x128xf32, #tpu.memory_space<vmem>>, vector<16x32xf32>,
    %c0_37 = arith.constant 0 : index
    %c32_38 = arith.constant 32 : index
    %70 = vector.load %arg7[%c0_37, %c32_38] : memref<16x128xf32, #tpu.memory_space<vmem>>, vector<16x12xf32>
    tpu.vector_store %arg7[%c0_37, %c32_38], %68 {strides = array<i32>} : memref<16x128xf32, #tpu.memory_space<vmem>>, vector<16x12xf32>,
    %c0_39 = arith.constant 0 : index
    %c0_40 = arith.constant 0 : index
    %71 = vector.load %arg7[%c0_39, %c0_40] : memref<16x128xf32, #tpu.memory_space<vmem>>, vector<16x128xf32>
    %c1 = arith.constant 1 : index
    %c0_41 = arith.constant 0 : index
    %c0_42 = arith.constant 0 : index
    %72 = vector.load %arg6[%c1, %c0_41, %c0_42] : memref<8x16x128xf32, #tpu.memory_space<vmem>>, vector<1x16x128xf32>
    %73 = vector.shape_cast %72 : vector<1x16x128xf32> to vector<16x128xf32>
    %74 = vector.shape_cast %71 : vector<16x128xf32> to vector<1x16x128xf32>
    tpu.vector_store %arg6[%c1, %c0_41, %c0_42], %74 {strides = array<i32>} : memref<8x16x128xf32, #tpu.memory_space<vmem>>, vector<1x16x128xf32>,
    %c0_43 = arith.constant 0 : index
    %c32_44 = arith.constant 32 : index
    %75 = vector.load %arg7[%c0_43, %c32_44] : memref<16x128xf32, #tpu.memory_space<vmem>>, vector<16x12xf32>
    %76 = arith.mulf %75, %75 : vector<16x12xf32>
    %c0_45 = arith.constant 0 : index
    %c44_46 = arith.constant 44 : index
    %77 = vector.load %arg7[%c0_45, %c44_46] : memref<16x128xf32, #tpu.memory_space<vmem>>, vector<16x12xf32>
    tpu.vector_store %arg7[%c0_45, %c44_46], %76 {strides = array<i32>} : memref<16x128xf32, #tpu.memory_space<vmem>>, vector<16x12xf32>,
    %c0_47 = arith.constant 0 : index
    %c0_48 = arith.constant 0 : index
    %78 = vector.load %arg7[%c0_47, %c0_48] : memref<16x128xf32, #tpu.memory_space<vmem>>, vector<16x128xf32>
    %79 = arith.truncf %78 : vector<16x128xf32> to vector<16x128xbf16>
    %cst_49 = arith.constant dense<0.000000e+00> : vector<16x68xf32>
    %80 = tpu.matmul %79, %10, %cst_49 {dimension_numbers = #tpu.dot_dimension_numbers<[1], [0], [0], [1], [0, 0, 1, 1], [], []>} : vector<16x128xbf16>, vector<128x68xbf16>, vector<16x68xf32> -> vector<16x68xf32>
    %81 = vector.extract_strided_slice %7 {offsets = [2, 0, 0], sizes = [1, 16, 68], strides = [1, 1, 1]} : vector<8x16x68xf32> to vector<1x16x68xf32>
    %82 = vector.shape_cast %81 : vector<1x16x68xf32> to vector<16x68xf32>
    %83 = vector.extract_strided_slice %80 {offsets = [0, 0], sizes = [16, 56], strides = [1, 1]} : vector<16x68xf32> to vector<16x56xf32>
    %84 = vector.extract_strided_slice %82 {offsets = [0, 0], sizes = [16, 56], strides = [1, 1]} : vector<16x68xf32> to vector<16x56xf32>
    %85 = arith.addf %83, %84 : vector<16x56xf32>
    %86 = vector.extract_strided_slice %80 {offsets = [0, 56], sizes = [16, 12], strides = [1, 1]} : vector<16x68xf32> to vector<16x12xf32>
    %87 = vector.extract_strided_slice %82 {offsets = [0, 56], sizes = [16, 12], strides = [1, 1]} : vector<16x68xf32> to vector<16x12xf32>
    %88 = vector.extract_strided_slice %85 {offsets = [0, 0], sizes = [16, 32], strides = [1, 1]} : vector<16x56xf32> to vector<16x32xf32>
    %89 = math.tanh %88 : vector<16x32xf32>
    %90 = vector.extract_strided_slice %85 {offsets = [0, 32], sizes = [16, 12], strides = [1, 1]} : vector<16x56xf32> to vector<16x12xf32>
    %91 = arith.negf %90 : vector<16x12xf32>
    %92 = math.exp %91 : vector<16x12xf32>
    %cst_50 = arith.constant 1.000000e+00 : f32
    %93 = vector.broadcast %cst_50 : f32 to vector<16x12xf32>
    %94 = arith.addf %93, %92 : vector<16x12xf32>
    %95 = arith.divf %93, %94 : vector<16x12xf32>
    %96 = vector.extract_strided_slice %85 {offsets = [0, 44], sizes = [16, 12], strides = [1, 1]} : vector<16x56xf32> to vector<16x12xf32>
    %97 = math.tanh %96 : vector<16x12xf32>
    %98 = arith.mulf %95, %86 : vector<16x12xf32>
    %99 = arith.mulf %97, %87 : vector<16x12xf32>
    %100 = arith.addf %98, %99 : vector<16x12xf32>
    %c0_51 = arith.constant 0 : index
    %c0_52 = arith.constant 0 : index
    %101 = vector.load %arg7[%c0_51, %c0_52] : memref<16x128xf32, #tpu.memory_space<vmem>>, vector<16x32xf32>
    tpu.vector_store %arg7[%c0_51, %c0_52], %89 {strides = array<i32>} : memref<16x128xf32, #tpu.memory_space<vmem>>, vector<16x32xf32>,
    %c0_53 = arith.constant 0 : index
    %c32_54 = arith.constant 32 : index
    %102 = vector.load %arg7[%c0_53, %c32_54] : memref<16x128xf32, #tpu.memory_space<vmem>>, vector<16x12xf32>
    tpu.vector_store %arg7[%c0_53, %c32_54], %100 {strides = array<i32>} : memref<16x128xf32, #tpu.memory_space<vmem>>, vector<16x12xf32>,
    %c0_55 = arith.constant 0 : index
    %c0_56 = arith.constant 0 : index
    %103 = vector.load %arg7[%c0_55, %c0_56] : memref<16x128xf32, #tpu.memory_space<vmem>>, vector<16x128xf32>
    %c2 = arith.constant 2 : index
    %c0_57 = arith.constant 0 : index
    %c0_58 = arith.constant 0 : index
    %104 = vector.load %arg6[%c2, %c0_57, %c0_58] : memref<8x16x128xf32, #tpu.memory_space<vmem>>, vector<1x16x128xf32>
    %105 = vector.shape_cast %104 : vector<1x16x128xf32> to vector<16x128xf32>
    %106 = vector.shape_cast %103 : vector<16x128xf32> to vector<1x16x128xf32>
    tpu.vector_store %arg6[%c2, %c0_57, %c0_58], %106 {strides = array<i32>} : memref<8x16x128xf32, #tpu.memory_space<vmem>>, vector<1x16x128xf32>,
    %c0_59 = arith.constant 0 : index
    %c32_60 = arith.constant 32 : index
    %107 = vector.load %arg7[%c0_59, %c32_60] : memref<16x128xf32, #tpu.memory_space<vmem>>, vector<16x12xf32>
    %108 = arith.mulf %107, %107 : vector<16x12xf32>
    %c0_61 = arith.constant 0 : index
    %c44_62 = arith.constant 44 : index
    %109 = vector.load %arg7[%c0_61, %c44_62] : memref<16x128xf32, #tpu.memory_space<vmem>>, vector<16x12xf32>
    tpu.vector_store %arg7[%c0_61, %c44_62], %108 {strides = array<i32>} : memref<16x128xf32, #tpu.memory_space<vmem>>, vector<16x12xf32>,
    %c0_63 = arith.constant 0 : index
    %c0_64 = arith.constant 0 : index
    %110 = vector.load %arg7[%c0_63, %c0_64] : memref<16x128xf32, #tpu.memory_space<vmem>>, vector<16x128xf32>
    %111 = arith.truncf %110 : vector<16x128xf32> to vector<16x128xbf16>
    %cst_65 = arith.constant dense<0.000000e+00> : vector<16x68xf32>
    %112 = tpu.matmul %111, %10, %cst_65 {dimension_numbers = #tpu.dot_dimension_numbers<[1], [0], [0], [1], [0, 0, 1, 1], [], []>} : vector<16x128xbf16>, vector<128x68xbf16>, vector<16x68xf32> -> vector<16x68xf32>
    %113 = vector.extract_strided_slice %7 {offsets = [3, 0, 0], sizes = [1, 16, 68], strides = [1, 1, 1]} : vector<8x16x68xf32> to vector<1x16x68xf32>
    %114 = vector.shape_cast %113 : vector<1x16x68xf32> to vector<16x68xf32>
    %115 = vector.extract_strided_slice %112 {offsets = [0, 0], sizes = [16, 56], strides = [1, 1]} : vector<16x68xf32> to vector<16x56xf32>
    %116 = vector.extract_strided_slice %114 {offsets = [0, 0], sizes = [16, 56], strides = [1, 1]} : vector<16x68xf32> to vector<16x56xf32>
    %117 = arith.addf %115, %116 : vector<16x56xf32>
    %118 = vector.extract_strided_slice %112 {offsets = [0, 56], sizes = [16, 12], strides = [1, 1]} : vector<16x68xf32> to vector<16x12xf32>
    %119 = vector.extract_strided_slice %114 {offsets = [0, 56], sizes = [16, 12], strides = [1, 1]} : vector<16x68xf32> to vector<16x12xf32>
    %120 = vector.extract_strided_slice %117 {offsets = [0, 0], sizes = [16, 32], strides = [1, 1]} : vector<16x56xf32> to vector<16x32xf32>
    %121 = math.tanh %120 : vector<16x32xf32>
    %122 = vector.extract_strided_slice %117 {offsets = [0, 32], sizes = [16, 12], strides = [1, 1]} : vector<16x56xf32> to vector<16x12xf32>
    %123 = arith.negf %122 : vector<16x12xf32>
    %124 = math.exp %123 : vector<16x12xf32>
    %cst_66 = arith.constant 1.000000e+00 : f32
    %125 = vector.broadcast %cst_66 : f32 to vector<16x12xf32>
    %126 = arith.addf %125, %124 : vector<16x12xf32>
    %127 = arith.divf %125, %126 : vector<16x12xf32>
    %128 = vector.extract_strided_slice %117 {offsets = [0, 44], sizes = [16, 12], strides = [1, 1]} : vector<16x56xf32> to vector<16x12xf32>
    %129 = math.tanh %128 : vector<16x12xf32>
    %130 = arith.mulf %127, %118 : vector<16x12xf32>
    %131 = arith.mulf %129, %119 : vector<16x12xf32>
    %132 = arith.addf %130, %131 : vector<16x12xf32>
    %c0_67 = arith.constant 0 : index
    %c0_68 = arith.constant 0 : index
    %133 = vector.load %arg7[%c0_67, %c0_68] : memref<16x128xf32, #tpu.memory_space<vmem>>, vector<16x32xf32>
    tpu.vector_store %arg7[%c0_67, %c0_68], %121 {strides = array<i32>} : memref<16x128xf32, #tpu.memory_space<vmem>>, vector<16x32xf32>,
    %c0_69 = arith.constant 0 : index
    %c32_70 = arith.constant 32 : index
    %134 = vector.load %arg7[%c0_69, %c32_70] : memref<16x128xf32, #tpu.memory_space<vmem>>, vector<16x12xf32>
    tpu.vector_store %arg7[%c0_69, %c32_70], %132 {strides = array<i32>} : memref<16x128xf32, #tpu.memory_space<vmem>>, vector<16x12xf32>,
    %c0_71 = arith.constant 0 : index
    %c0_72 = arith.constant 0 : index
    %135 = vector.load %arg7[%c0_71, %c0_72] : memref<16x128xf32, #tpu.memory_space<vmem>>, vector<16x128xf32>
    %c3 = arith.constant 3 : index
    %c0_73 = arith.constant 0 : index
    %c0_74 = arith.constant 0 : index
    %136 = vector.load %arg6[%c3, %c0_73, %c0_74] : memref<8x16x128xf32, #tpu.memory_space<vmem>>, vector<1x16x128xf32>
    %137 = vector.shape_cast %136 : vector<1x16x128xf32> to vector<16x128xf32>
    %138 = vector.shape_cast %135 : vector<16x128xf32> to vector<1x16x128xf32>
    tpu.vector_store %arg6[%c3, %c0_73, %c0_74], %138 {strides = array<i32>} : memref<8x16x128xf32, #tpu.memory_space<vmem>>, vector<1x16x128xf32>,
    %c0_75 = arith.constant 0 : index
    %c32_76 = arith.constant 32 : index
    %139 = vector.load %arg7[%c0_75, %c32_76] : memref<16x128xf32, #tpu.memory_space<vmem>>, vector<16x12xf32>
    %140 = arith.mulf %139, %139 : vector<16x12xf32>
    %c0_77 = arith.constant 0 : index
    %c44_78 = arith.constant 44 : index
    %141 = vector.load %arg7[%c0_77, %c44_78] : memref<16x128xf32, #tpu.memory_space<vmem>>, vector<16x12xf32>
    tpu.vector_store %arg7[%c0_77, %c44_78], %140 {strides = array<i32>} : memref<16x128xf32, #tpu.memory_space<vmem>>, vector<16x12xf32>,
    %c0_79 = arith.constant 0 : index
    %c0_80 = arith.constant 0 : index
    %142 = vector.load %arg7[%c0_79, %c0_80] : memref<16x128xf32, #tpu.memory_space<vmem>>, vector<16x128xf32>
    %143 = arith.truncf %142 : vector<16x128xf32> to vector<16x128xbf16>
    %cst_81 = arith.constant dense<0.000000e+00> : vector<16x68xf32>
    %144 = tpu.matmul %143, %10, %cst_81 {dimension_numbers = #tpu.dot_dimension_numbers<[1], [0], [0], [1], [0, 0, 1, 1], [], []>} : vector<16x128xbf16>, vector<128x68xbf16>, vector<16x68xf32> -> vector<16x68xf32>
    %145 = vector.extract_strided_slice %7 {offsets = [4, 0, 0], sizes = [1, 16, 68], strides = [1, 1, 1]} : vector<8x16x68xf32> to vector<1x16x68xf32>
    %146 = vector.shape_cast %145 : vector<1x16x68xf32> to vector<16x68xf32>
    %147 = vector.extract_strided_slice %144 {offsets = [0, 0], sizes = [16, 56], strides = [1, 1]} : vector<16x68xf32> to vector<16x56xf32>
    %148 = vector.extract_strided_slice %146 {offsets = [0, 0], sizes = [16, 56], strides = [1, 1]} : vector<16x68xf32> to vector<16x56xf32>
    %149 = arith.addf %147, %148 : vector<16x56xf32>
    %150 = vector.extract_strided_slice %144 {offsets = [0, 56], sizes = [16, 12], strides = [1, 1]} : vector<16x68xf32> to vector<16x12xf32>
    %151 = vector.extract_strided_slice %146 {offsets = [0, 56], sizes = [16, 12], strides = [1, 1]} : vector<16x68xf32> to vector<16x12xf32>
    %152 = vector.extract_strided_slice %149 {offsets = [0, 0], sizes = [16, 32], strides = [1, 1]} : vector<16x56xf32> to vector<16x32xf32>
    %153 = math.tanh %152 : vector<16x32xf32>
    %154 = vector.extract_strided_slice %149 {offsets = [0, 32], sizes = [16, 12], strides = [1, 1]} : vector<16x56xf32> to vector<16x12xf32>
    %155 = arith.negf %154 : vector<16x12xf32>
    %156 = math.exp %155 : vector<16x12xf32>
    %cst_82 = arith.constant 1.000000e+00 : f32
    %157 = vector.broadcast %cst_82 : f32 to vector<16x12xf32>
    %158 = arith.addf %157, %156 : vector<16x12xf32>
    %159 = arith.divf %157, %158 : vector<16x12xf32>
    %160 = vector.extract_strided_slice %149 {offsets = [0, 44], sizes = [16, 12], strides = [1, 1]} : vector<16x56xf32> to vector<16x12xf32>
    %161 = math.tanh %160 : vector<16x12xf32>
    %162 = arith.mulf %159, %150 : vector<16x12xf32>
    %163 = arith.mulf %161, %151 : vector<16x12xf32>
    %164 = arith.addf %162, %163 : vector<16x12xf32>
    %c0_83 = arith.constant 0 : index
    %c0_84 = arith.constant 0 : index
    %165 = vector.load %arg7[%c0_83, %c0_84] : memref<16x128xf32, #tpu.memory_space<vmem>>, vector<16x32xf32>
    tpu.vector_store %arg7[%c0_83, %c0_84], %153 {strides = array<i32>} : memref<16x128xf32, #tpu.memory_space<vmem>>, vector<16x32xf32>,
    %c0_85 = arith.constant 0 : index
    %c32_86 = arith.constant 32 : index
    %166 = vector.load %arg7[%c0_85, %c32_86] : memref<16x128xf32, #tpu.memory_space<vmem>>, vector<16x12xf32>
    tpu.vector_store %arg7[%c0_85, %c32_86], %164 {strides = array<i32>} : memref<16x128xf32, #tpu.memory_space<vmem>>, vector<16x12xf32>,
    %c0_87 = arith.constant 0 : index
    %c0_88 = arith.constant 0 : index
    %167 = vector.load %arg7[%c0_87, %c0_88] : memref<16x128xf32, #tpu.memory_space<vmem>>, vector<16x128xf32>
    %c4 = arith.constant 4 : index
    %c0_89 = arith.constant 0 : index
    %c0_90 = arith.constant 0 : index
    %168 = vector.load %arg6[%c4, %c0_89, %c0_90] : memref<8x16x128xf32, #tpu.memory_space<vmem>>, vector<1x16x128xf32>
    %169 = vector.shape_cast %168 : vector<1x16x128xf32> to vector<16x128xf32>
    %170 = vector.shape_cast %167 : vector<16x128xf32> to vector<1x16x128xf32>
    tpu.vector_store %arg6[%c4, %c0_89, %c0_90], %170 {strides = array<i32>} : memref<8x16x128xf32, #tpu.memory_space<vmem>>, vector<1x16x128xf32>,
    %c0_91 = arith.constant 0 : index
    %c32_92 = arith.constant 32 : index
    %171 = vector.load %arg7[%c0_91, %c32_92] : memref<16x128xf32, #tpu.memory_space<vmem>>, vector<16x12xf32>
    %172 = arith.mulf %171, %171 : vector<16x12xf32>
    %c0_93 = arith.constant 0 : index
    %c44_94 = arith.constant 44 : index
    %173 = vector.load %arg7[%c0_93, %c44_94] : memref<16x128xf32, #tpu.memory_space<vmem>>, vector<16x12xf32>
    tpu.vector_store %arg7[%c0_93, %c44_94], %172 {strides = array<i32>} : memref<16x128xf32, #tpu.memory_space<vmem>>, vector<16x12xf32>,
    %c0_95 = arith.constant 0 : index
    %c0_96 = arith.constant 0 : index
    %174 = vector.load %arg7[%c0_95, %c0_96] : memref<16x128xf32, #tpu.memory_space<vmem>>, vector<16x128xf32>
    %175 = arith.truncf %174 : vector<16x128xf32> to vector<16x128xbf16>
    %cst_97 = arith.constant dense<0.000000e+00> : vector<16x68xf32>
    %176 = tpu.matmul %175, %10, %cst_97 {dimension_numbers = #tpu.dot_dimension_numbers<[1], [0], [0], [1], [0, 0, 1, 1], [], []>} : vector<16x128xbf16>, vector<128x68xbf16>, vector<16x68xf32> -> vector<16x68xf32>
    %177 = vector.extract_strided_slice %7 {offsets = [5, 0, 0], sizes = [1, 16, 68], strides = [1, 1, 1]} : vector<8x16x68xf32> to vector<1x16x68xf32>
    %178 = vector.shape_cast %177 : vector<1x16x68xf32> to vector<16x68xf32>
    %179 = vector.extract_strided_slice %176 {offsets = [0, 0], sizes = [16, 56], strides = [1, 1]} : vector<16x68xf32> to vector<16x56xf32>
    %180 = vector.extract_strided_slice %178 {offsets = [0, 0], sizes = [16, 56], strides = [1, 1]} : vector<16x68xf32> to vector<16x56xf32>
    %181 = arith.addf %179, %180 : vector<16x56xf32>
    %182 = vector.extract_strided_slice %176 {offsets = [0, 56], sizes = [16, 12], strides = [1, 1]} : vector<16x68xf32> to vector<16x12xf32>
    %183 = vector.extract_strided_slice %178 {offsets = [0, 56], sizes = [16, 12], strides = [1, 1]} : vector<16x68xf32> to vector<16x12xf32>
    %184 = vector.extract_strided_slice %181 {offsets = [0, 0], sizes = [16, 32], strides = [1, 1]} : vector<16x56xf32> to vector<16x32xf32>
    %185 = math.tanh %184 : vector<16x32xf32>
    %186 = vector.extract_strided_slice %181 {offsets = [0, 32], sizes = [16, 12], strides = [1, 1]} : vector<16x56xf32> to vector<16x12xf32>
    %187 = arith.negf %186 : vector<16x12xf32>
    %188 = math.exp %187 : vector<16x12xf32>
    %cst_98 = arith.constant 1.000000e+00 : f32
    %189 = vector.broadcast %cst_98 : f32 to vector<16x12xf32>
    %190 = arith.addf %189, %188 : vector<16x12xf32>
    %191 = arith.divf %189, %190 : vector<16x12xf32>
    %192 = vector.extract_strided_slice %181 {offsets = [0, 44], sizes = [16, 12], strides = [1, 1]} : vector<16x56xf32> to vector<16x12xf32>
    %193 = math.tanh %192 : vector<16x12xf32>
    %194 = arith.mulf %191, %182 : vector<16x12xf32>
    %195 = arith.mulf %193, %183 : vector<16x12xf32>
    %196 = arith.addf %194, %195 : vector<16x12xf32>
    %c0_99 = arith.constant 0 : index
    %c0_100 = arith.constant 0 : index
    %197 = vector.load %arg7[%c0_99, %c0_100] : memref<16x128xf32, #tpu.memory_space<vmem>>, vector<16x32xf32>
    tpu.vector_store %arg7[%c0_99, %c0_100], %185 {strides = array<i32>} : memref<16x128xf32, #tpu.memory_space<vmem>>, vector<16x32xf32>,
    %c0_101 = arith.constant 0 : index
    %c32_102 = arith.constant 32 : index
    %198 = vector.load %arg7[%c0_101, %c32_102] : memref<16x128xf32, #tpu.memory_space<vmem>>, vector<16x12xf32>
    tpu.vector_store %arg7[%c0_101, %c32_102], %196 {strides = array<i32>} : memref<16x128xf32, #tpu.memory_space<vmem>>, vector<16x12xf32>,
    %c0_103 = arith.constant 0 : index
    %c0_104 = arith.constant 0 : index
    %199 = vector.load %arg7[%c0_103, %c0_104] : memref<16x128xf32, #tpu.memory_space<vmem>>, vector<16x128xf32>
    %c5 = arith.constant 5 : index
    %c0_105 = arith.constant 0 : index
    %c0_106 = arith.constant 0 : index
    %200 = vector.load %arg6[%c5, %c0_105, %c0_106] : memref<8x16x128xf32, #tpu.memory_space<vmem>>, vector<1x16x128xf32>
    %201 = vector.shape_cast %200 : vector<1x16x128xf32> to vector<16x128xf32>
    %202 = vector.shape_cast %199 : vector<16x128xf32> to vector<1x16x128xf32>
    tpu.vector_store %arg6[%c5, %c0_105, %c0_106], %202 {strides = array<i32>} : memref<8x16x128xf32, #tpu.memory_space<vmem>>, vector<1x16x128xf32>,
    %c0_107 = arith.constant 0 : index
    %c32_108 = arith.constant 32 : index
    %203 = vector.load %arg7[%c0_107, %c32_108] : memref<16x128xf32, #tpu.memory_space<vmem>>, vector<16x12xf32>
    %204 = arith.mulf %203, %203 : vector<16x12xf32>
    %c0_109 = arith.constant 0 : index
    %c44_110 = arith.constant 44 : index
    %205 = vector.load %arg7[%c0_109, %c44_110] : memref<16x128xf32, #tpu.memory_space<vmem>>, vector<16x12xf32>
    tpu.vector_store %arg7[%c0_109, %c44_110], %204 {strides = array<i32>} : memref<16x128xf32, #tpu.memory_space<vmem>>, vector<16x12xf32>,
    %c0_111 = arith.constant 0 : index
    %c0_112 = arith.constant 0 : index
    %206 = vector.load %arg7[%c0_111, %c0_112] : memref<16x128xf32, #tpu.memory_space<vmem>>, vector<16x128xf32>
    %207 = arith.truncf %206 : vector<16x128xf32> to vector<16x128xbf16>
    %cst_113 = arith.constant dense<0.000000e+00> : vector<16x68xf32>
    %208 = tpu.matmul %207, %10, %cst_113 {dimension_numbers = #tpu.dot_dimension_numbers<[1], [0], [0], [1], [0, 0, 1, 1], [], []>} : vector<16x128xbf16>, vector<128x68xbf16>, vector<16x68xf32> -> vector<16x68xf32>
    %209 = vector.extract_strided_slice %7 {offsets = [6, 0, 0], sizes = [1, 16, 68], strides = [1, 1, 1]} : vector<8x16x68xf32> to vector<1x16x68xf32>
    %210 = vector.shape_cast %209 : vector<1x16x68xf32> to vector<16x68xf32>
    %211 = vector.extract_strided_slice %208 {offsets = [0, 0], sizes = [16, 56], strides = [1, 1]} : vector<16x68xf32> to vector<16x56xf32>
    %212 = vector.extract_strided_slice %210 {offsets = [0, 0], sizes = [16, 56], strides = [1, 1]} : vector<16x68xf32> to vector<16x56xf32>
    %213 = arith.addf %211, %212 : vector<16x56xf32>
    %214 = vector.extract_strided_slice %208 {offsets = [0, 56], sizes = [16, 12], strides = [1, 1]} : vector<16x68xf32> to vector<16x12xf32>
    %215 = vector.extract_strided_slice %210 {offsets = [0, 56], sizes = [16, 12], strides = [1, 1]} : vector<16x68xf32> to vector<16x12xf32>
    %216 = vector.extract_strided_slice %213 {offsets = [0, 0], sizes = [16, 32], strides = [1, 1]} : vector<16x56xf32> to vector<16x32xf32>
    %217 = math.tanh %216 : vector<16x32xf32>
    %218 = vector.extract_strided_slice %213 {offsets = [0, 32], sizes = [16, 12], strides = [1, 1]} : vector<16x56xf32> to vector<16x12xf32>
    %219 = arith.negf %218 : vector<16x12xf32>
    %220 = math.exp %219 : vector<16x12xf32>
    %cst_114 = arith.constant 1.000000e+00 : f32
    %221 = vector.broadcast %cst_114 : f32 to vector<16x12xf32>
    %222 = arith.addf %221, %220 : vector<16x12xf32>
    %223 = arith.divf %221, %222 : vector<16x12xf32>
    %224 = vector.extract_strided_slice %213 {offsets = [0, 44], sizes = [16, 12], strides = [1, 1]} : vector<16x56xf32> to vector<16x12xf32>
    %225 = math.tanh %224 : vector<16x12xf32>
    %226 = arith.mulf %223, %214 : vector<16x12xf32>
    %227 = arith.mulf %225, %215 : vector<16x12xf32>
    %228 = arith.addf %226, %227 : vector<16x12xf32>
    %c0_115 = arith.constant 0 : index
    %c0_116 = arith.constant 0 : index
    %229 = vector.load %arg7[%c0_115, %c0_116] : memref<16x128xf32, #tpu.memory_space<vmem>>, vector<16x32xf32>
    tpu.vector_store %arg7[%c0_115, %c0_116], %217 {strides = array<i32>} : memref<16x128xf32, #tpu.memory_space<vmem>>, vector<16x32xf32>,
    %c0_117 = arith.constant 0 : index
    %c32_118 = arith.constant 32 : index
    %230 = vector.load %arg7[%c0_117, %c32_118] : memref<16x128xf32, #tpu.memory_space<vmem>>, vector<16x12xf32>
    tpu.vector_store %arg7[%c0_117, %c32_118], %228 {strides = array<i32>} : memref<16x128xf32, #tpu.memory_space<vmem>>, vector<16x12xf32>,
    %c0_119 = arith.constant 0 : index
    %c0_120 = arith.constant 0 : index
    %231 = vector.load %arg7[%c0_119, %c0_120] : memref<16x128xf32, #tpu.memory_space<vmem>>, vector<16x128xf32>
    %c6 = arith.constant 6 : index
    %c0_121 = arith.constant 0 : index
    %c0_122 = arith.constant 0 : index
    %232 = vector.load %arg6[%c6, %c0_121, %c0_122] : memref<8x16x128xf32, #tpu.memory_space<vmem>>, vector<1x16x128xf32>
    %233 = vector.shape_cast %232 : vector<1x16x128xf32> to vector<16x128xf32>
    %234 = vector.shape_cast %231 : vector<16x128xf32> to vector<1x16x128xf32>
    tpu.vector_store %arg6[%c6, %c0_121, %c0_122], %234 {strides = array<i32>} : memref<8x16x128xf32, #tpu.memory_space<vmem>>, vector<1x16x128xf32>,
    %c0_123 = arith.constant 0 : index
    %c32_124 = arith.constant 32 : index
    %235 = vector.load %arg7[%c0_123, %c32_124] : memref<16x128xf32, #tpu.memory_space<vmem>>, vector<16x12xf32>
    %236 = arith.mulf %235, %235 : vector<16x12xf32>
    %c0_125 = arith.constant 0 : index
    %c44_126 = arith.constant 44 : index
    %237 = vector.load %arg7[%c0_125, %c44_126] : memref<16x128xf32, #tpu.memory_space<vmem>>, vector<16x12xf32>
    tpu.vector_store %arg7[%c0_125, %c44_126], %236 {strides = array<i32>} : memref<16x128xf32, #tpu.memory_space<vmem>>, vector<16x12xf32>,
    %c0_127 = arith.constant 0 : index
    %c0_128 = arith.constant 0 : index
    %238 = vector.load %arg7[%c0_127, %c0_128] : memref<16x128xf32, #tpu.memory_space<vmem>>, vector<16x128xf32>
    %239 = arith.truncf %238 : vector<16x128xf32> to vector<16x128xbf16>
    %cst_129 = arith.constant dense<0.000000e+00> : vector<16x68xf32>
    %240 = tpu.matmul %239, %10, %cst_129 {dimension_numbers = #tpu.dot_dimension_numbers<[1], [0], [0], [1], [0, 0, 1, 1], [], []>} : vector<16x128xbf16>, vector<128x68xbf16>, vector<16x68xf32> -> vector<16x68xf32>
    %241 = vector.extract_strided_slice %7 {offsets = [7, 0, 0], sizes = [1, 16, 68], strides = [1, 1, 1]} : vector<8x16x68xf32> to vector<1x16x68xf32>
    %242 = vector.shape_cast %241 : vector<1x16x68xf32> to vector<16x68xf32>
    %243 = vector.extract_strided_slice %240 {offsets = [0, 0], sizes = [16, 56], strides = [1, 1]} : vector<16x68xf32> to vector<16x56xf32>
    %244 = vector.extract_strided_slice %242 {offsets = [0, 0], sizes = [16, 56], strides = [1, 1]} : vector<16x68xf32> to vector<16x56xf32>
    %245 = arith.addf %243, %244 : vector<16x56xf32>
    %246 = vector.extract_strided_slice %240 {offsets = [0, 56], sizes = [16, 12], strides = [1, 1]} : vector<16x68xf32> to vector<16x12xf32>
    %247 = vector.extract_strided_slice %242 {offsets = [0, 56], sizes = [16, 12], strides = [1, 1]} : vector<16x68xf32> to vector<16x12xf32>
    %248 = vector.extract_strided_slice %245 {offsets = [0, 0], sizes = [16, 32], strides = [1, 1]} : vector<16x56xf32> to vector<16x32xf32>
    %249 = math.tanh %248 : vector<16x32xf32>
    %250 = vector.extract_strided_slice %245 {offsets = [0, 32], sizes = [16, 12], strides = [1, 1]} : vector<16x56xf32> to vector<16x12xf32>
    %251 = arith.negf %250 : vector<16x12xf32>
    %252 = math.exp %251 : vector<16x12xf32>
    %cst_130 = arith.constant 1.000000e+00 : f32
    %253 = vector.broadcast %cst_130 : f32 to vector<16x12xf32>
    %254 = arith.addf %253, %252 : vector<16x12xf32>
    %255 = arith.divf %253, %254 : vector<16x12xf32>
    %256 = vector.extract_strided_slice %245 {offsets = [0, 44], sizes = [16, 12], strides = [1, 1]} : vector<16x56xf32> to vector<16x12xf32>
    %257 = math.tanh %256 : vector<16x12xf32>
    %258 = arith.mulf %255, %246 : vector<16x12xf32>
    %259 = arith.mulf %257, %247 : vector<16x12xf32>
    %260 = arith.addf %258, %259 : vector<16x12xf32>
    %c0_131 = arith.constant 0 : index
    %c0_132 = arith.constant 0 : index
    %261 = vector.load %arg7[%c0_131, %c0_132] : memref<16x128xf32, #tpu.memory_space<vmem>>, vector<16x32xf32>
    tpu.vector_store %arg7[%c0_131, %c0_132], %249 {strides = array<i32>} : memref<16x128xf32, #tpu.memory_space<vmem>>, vector<16x32xf32>,
    %c0_133 = arith.constant 0 : index
    %c32_134 = arith.constant 32 : index
    %262 = vector.load %arg7[%c0_133, %c32_134] : memref<16x128xf32, #tpu.memory_space<vmem>>, vector<16x12xf32>
    tpu.vector_store %arg7[%c0_133, %c32_134], %260 {strides = array<i32>} : memref<16x128xf32, #tpu.memory_space<vmem>>, vector<16x12xf32>,
    %c0_135 = arith.constant 0 : index
    %c0_136 = arith.constant 0 : index
    %263 = vector.load %arg7[%c0_135, %c0_136] : memref<16x128xf32, #tpu.memory_space<vmem>>, vector<16x128xf32>
    %c7 = arith.constant 7 : index
    %c0_137 = arith.constant 0 : index
    %c0_138 = arith.constant 0 : index
    %264 = vector.load %arg6[%c7, %c0_137, %c0_138] : memref<8x16x128xf32, #tpu.memory_space<vmem>>, vector<1x16x128xf32>
    %265 = vector.shape_cast %264 : vector<1x16x128xf32> to vector<16x128xf32>
    %266 = vector.shape_cast %263 : vector<16x128xf32> to vector<1x16x128xf32>
    tpu.vector_store %arg6[%c7, %c0_137, %c0_138], %266 {strides = array<i32>} : memref<8x16x128xf32, #tpu.memory_space<vmem>>, vector<1x16x128xf32>,
    return
  }
  func.func @transform_0(%arg0: i32) -> (i32, i32, i32) {
    %c0_i32 = arith.constant 0 : i32
    %c0_i32_0 = arith.constant 0 : i32
    %c0_i32_1 = arith.constant 0 : i32
    return %c0_i32, %arg0, %c0_i32_0 : i32, i32, i32
  }
  func.func @transform_1(%arg0: i32) -> (i32, i32) {
    %c0_i32 = arith.constant 0 : i32
    %c0_i32_0 = arith.constant 0 : i32
    return %arg0, %c0_i32 : i32, i32
  }
  func.func @transform_2(%arg0: i32) -> (i32, i32) {
    %c0_i32 = arith.constant 0 : i32
    %c0_i32_0 = arith.constant 0 : i32
    %c0_i32_1 = arith.constant 0 : i32
    return %c0_i32, %c0_i32_0 : i32, i32
  }
  func.func @transform_3(%arg0: i32) -> (i32, i32) {
    %c0_i32 = arith.constant 0 : i32
    %c0_i32_0 = arith.constant 0 : i32
    %c0_i32_1 = arith.constant 0 : i32
    return %c0_i32, %c0_i32_0 : i32, i32
  }
  func.func @transform_4(%arg0: i32) -> (i32, i32) {
    %c0_i32 = arith.constant 0 : i32
    %c0_i32_0 = arith.constant 0 : i32
    %c0_i32_1 = arith.constant 0 : i32
    return %c0_i32, %c0_i32_0 : i32, i32
  }
  func.func @transform_5(%arg0: i32) -> (i32, i32, i32) {
    %c0_i32 = arith.constant 0 : i32
    %c0_i32_0 = arith.constant 0 : i32
    %c0_i32_1 = arith.constant 0 : i32
    return %c0_i32, %arg0, %c0_i32_0 : i32, i32, i32
  }
}

</mosaic_0001>

<llo_original>
// kernel: tpu_custom_call.1
$region0: #{tpu_custom_call.1}
  #allocation0 [shape = 'u32[]', space=smem, size = 0x4, offset = 0x4, fixed_abs, tag = 'smem constant byte address 0x4 - core index']
  #allocation1 [shape = 'u32[144,128]{1,0:T(1,128)}', space=vmem, size = 0x12000, scoped, tag = 'internal scratch']
  #allocation2 [shape = 'f32[16,128]{1,0:T(8,128)}', space=vmem, size = 0x2000, scoped, tag = 'scratch operand']
  %s0 = inlined_call_operand.vmem [shape: bf16[8,16,36], index: 0, kind: input, shape index: {}]
  %s1 = inlined_call_operand.vmem [shape: f32[16,128], index: 1, kind: input, shape index: {}]
  %s2 = inlined_call_operand.vmem [shape: bf16[36,68], index: 2, kind: input, shape index: {}]
  %s3 = inlined_call_operand.vmem [shape: f32[1,68], index: 3, kind: input, shape index: {}]
  %s4 = inlined_call_operand.vmem [shape: bf16[128,68], index: 4, kind: input, shape index: {}]
  %s5 = inlined_call_operand.hbm [shape: f32[8,16,128], index: 5, kind: output, shape index: {}]
  %s6 = sld [smem:[#allocation0]]
  $region30: #{tpu_custom_call.1} parent=0
    _
  %s8 = ssub.s32 1, %s6
  %s9 = scalar_select 0, %s8, %s6
  $region1: #{tpu_custom_call.1} parent=0
    #allocation3 [shape = 'u8[65536]{0}', space=vmem, size = 0x10000, scoped, tag = 'output window, operand 0, single buffered']
    #allocation4 [shape = 's32[1]{0}', space=sflag, size = 0x4, scoped, tag = 'scoped memory for tpu_custom_call.1']
    %10 = vsyncpa [#allocation4], 0
    // Predicated region
    $region2: #{tpu_custom_call.1} parent=1 // pred_check
      _
    $region3: #{tpu_custom_call.1} parent=1 // pred_check_branch
      %12 = sbr.rel (0) target = $region5
    $region4: #{tpu_custom_call.1} parent=1 // pred_region
      _
    $region5: #{tpu_custom_call.1} parent=1 // pred_fallthru
      _
    // Predicated region
    $region6: #{tpu_custom_call.1} parent=1 // pred_check
      _
    $region7: #{tpu_custom_call.1} parent=1 // pred_check_branch
      %14 = sbr.rel (0) target = $region9
    $region8: #{tpu_custom_call.1} parent=1 // pred_region
      _
    $region9: #{tpu_custom_call.1} parent=1 // pred_fallthru
      _
    // Predicated region
    $region10: #{tpu_custom_call.1} parent=1 // pred_check
      _
    $region11: #{tpu_custom_call.1} parent=1 // pred_check_branch
      %16 = sbr.rel (0) target = $region13
    $region12: #{tpu_custom_call.1} parent=1 // pred_region
      _
    $region13: #{tpu_custom_call.1} parent=1 // pred_fallthru
      _
    // Predicated region
    $region14: #{tpu_custom_call.1} parent=1 // pred_check
      _
    $region15: #{tpu_custom_call.1} parent=1 // pred_check_branch
      %18 = sbr.rel (0) target = $region17
    $region16: #{tpu_custom_call.1} parent=1 // pred_region
      _
    $region17: #{tpu_custom_call.1} parent=1 // pred_fallthru
      _
    // Predicated region
    $region18: #{tpu_custom_call.1} parent=1 // pred_check
      _
    $region19: #{tpu_custom_call.1} parent=1 // pred_check_branch
      %20 = sbr.rel (0) target = $region21
    $region20: #{tpu_custom_call.1} parent=1 // pred_region
      _
    $region21: #{tpu_custom_call.1} parent=1 // pred_fallthru
      _
    %v22 = vld [vmem:[%s0] sm:$0xf]
    %v23 = vld [vmem:[%s0 + $0x4] sm:$0xf]
    %v24 = vld [vmem:[%s0 + $0x8] sm:$0xf]
    %v25 = vld [vmem:[%s0 + $0xc] sm:$0xf]
    %v26 = vld [vmem:[%s0 + $0x10] sm:$0xf]
    %v27 = vld [vmem:[%s0 + $0x14] sm:$0xf]
    %v28 = vld [vmem:[%s0 + $0x18] sm:$0xf]
    %v29 = vld [vmem:[%s0 + $0x1c] sm:$0xf]
    %v30 = vld [vmem:[%s0 + $0x20] sm:$0xf]
    %v31 = vld [vmem:[%s0 + $0x24] sm:$0xf]
    %v32 = vld [vmem:[%s0 + $0x28] sm:$0xf]
    %v33 = vld [vmem:[%s0 + $0x2c] sm:$0xf]
    %v34 = vld [vmem:[%s0 + $0x30] sm:$0xf]
    %v35 = vld [vmem:[%s0 + $0x34] sm:$0xf]
    %v36 = vld [vmem:[%s0 + $0x38] sm:$0xf]
    %v37 = vld [vmem:[%s0 + $0x3c] sm:$0xf]
    %v38 = vld [vmem:[%s2] sm:$0xf]
    %v39 = vld [vmem:[%s2 + $0x4] sm:$0xf]
    %v40 = vld [vmem:[%s2 + $0x8] sm:$0xf]
    %v41 = vld [vmem:[%s2 + $0xc] sm:$0xf]
    %v42 = vld [vmem:[%s2 + $0x10] sm:$0x3]
    %v43 = vld [vmem:[%s3] sm:$0x1]
    %v45 = vlaneseq
    %v46 = vshrl.u32 %v45, 7
    %v47 = vsub.s32 0, %v46
    %v48 = vrot.slane %v43, %v47
    %v66 = vunpack.c.l.b16 %v22
    %v67 = vunpack.c.l.b16 %v23
    %v68 = vunpack.c.l.b16 %v24
    %v69 = vunpack.c.l.b16 %v25
    %v70 = vunpack.c.l.b16 %v26
    %v71 = vunpack.c.l.b16 %v27
    %v72 = vunpack.c.l.b16 %v28
    %v73 = vunpack.c.l.b16 %v29
    %v74 = vunpack.c.l.b16 %v30
    %v75 = vunpack.c.l.b16 %v31
    %v76 = vunpack.c.l.b16 %v32
    %v77 = vunpack.c.l.b16 %v33
    %v78 = vunpack.c.l.b16 %v34
    %v79 = vunpack.c.l.b16 %v35
    %v80 = vunpack.c.l.b16 %v36
    %v81 = vunpack.c.l.b16 %v37
    %v82 = vpack.c.b16 %v67, %v66
    %v83 = vpack.c.b16 %v69, %v68
    %v84 = vpack.c.b16 %v71, %v70
    %v85 = vpack.c.b16 %v73, %v72
    %v86 = vpack.c.b16 %v75, %v74
    %v87 = vpack.c.b16 %v77, %v76
    %v88 = vpack.c.b16 %v79, %v78
    %v89 = vpack.c.b16 %v81, %v80
    %v95 = vunpack.c.l.b16 %v38
    %v96 = vunpack.c.l.b16 %v39
    %v97 = vunpack.c.l.b16 %v40
    %v98 = vunpack.c.l.b16 %v41
    %v99 = vunpack.c.l.b16 %v42
    %v100 = vpack.c.b16 %v96, %v95
    %v101 = vpack.c.b16 %v98, %v97
    %v102 = vpack.c.b16 %v99, %v99
    %vm105 = vcmask 293888
    %v107 = vsel %vm105, %v82, 0
    %v110 = vsel %vm105, %v83, 0
    %v113 = vsel %vm105, %v84, 0
    %v116 = vsel %vm105, %v85, 0
    %v119 = vsel %vm105, %v86, 0
    %v122 = vsel %vm105, %v87, 0
    %v125 = vsel %vm105, %v88, 0
    %v128 = vsel %vm105, %v89, 0
    %vm130 = vcmask 1041408
    %v132 = vsel %vm130, %v102, 0
    %134 = vmatprep.subr.bf16.mxu0 0
    %135 = vmatpush1.bf16.msra.mxu0 %v100
    %136 = vmatprep.subr.bf16.mxu0 0
    %137 = vmatpush1.bf16.msra.mxu0 %v101
    %138 = vmatprep.subr.bf16.mxu0 0
    %139 = vmatpush1.bf16.msra.mxu0 %v132
    %140 = vmatprep.subr.bf16.mxu0 0
    %141 = vmatpush1.bf16.msra.mxu0 0
    %142 = vmatprep.subr.bf16.mxu0 0
    %143 = vmatpush1.bf16.msra.mxu0 0
    %144 = vmatprep.subr.bf16.mxu0 0
    %145 = vmatpush1.bf16.msra.mxu0 0
    %146 = vmatprep.subr.bf16.mxu0 0
    %147 = vmatpush1.bf16.msra.mxu0 0
    %148 = vmatprep.subr.bf16.mxu0 0
    %149 = vmatpush1.bf16.msra.mxu0 0
    %150 = vmatprep.subr.bf16.mxu0 0
    %151 = vmatpush1.bf16.msra.mxu0 0
    %152 = vmatprep.subr.bf16.mxu0 0
    %153 = vmatpush1.bf16.msra.mxu0 0
    %154 = vmatprep.subr.bf16.mxu0 0
    %155 = vmatpush1.bf16.msra.mxu0 0
    %156 = vmatprep.subr.bf16.mxu0 0
    %157 = vmatpush1.bf16.msra.mxu0 0
    %158 = vmatprep.subr.bf16.mxu0 0
    %159 = vmatpush1.bf16.msra.mxu0 0
    %160 = vmatprep.subr.bf16.mxu0 0
    %161 = vmatpush1.bf16.msra.mxu0 0
    %162 = vmatprep.subr.bf16.mxu0 0
    %163 = vmatpush1.bf16.msra.mxu0 0
    %164 = vmatprep.subr.bf16.mxu0 0
    %165 = vmatpush1.bf16.msra.mxu0 0
    %166 = vmatprep.mubr.bf16.mxu0 0
    %167 = vmatmul.mubr.bf16.gmra.mrb[0].mxu0 %v107
    %v168 = vpop.f32.mrb[0].mxu0
    %v169 = vadd.f32 %v48, %v168
    %v170 = vpop.f32.mrb[0].mxu0
    %v171 = vpop.f32.mrb[0].mxu0
    %v172 = vadd.f32 %v48, %v171
    %v173 = vpop.f32.mrb[0].mxu0
    %174 = vmatprep.mubr.bf16.mxu0 0
    %175 = vmatmul.mubr.bf16.gmra.mrb[0].mxu0 %v110
    %v176 = vpop.f32.mrb[0].mxu0
    %v177 = vadd.f32 %v48, %v176
    %v178 = vpop.f32.mrb[0].mxu0
    %v179 = vpop.f32.mrb[0].mxu0
    %v180 = vadd.f32 %v48, %v179
    %v181 = vpop.f32.mrb[0].mxu0
    %182 = vmatprep.mubr.bf16.mxu0 0
    %183 = vmatmul.mubr.bf16.gmra.mrb[0].mxu0 %v113
    %v184 = vpop.f32.mrb[0].mxu0
    %v185 = vadd.f32 %v48, %v184
    %v186 = vpop.f32.mrb[0].mxu0
    %v187 = vpop.f32.mrb[0].mxu0
    %v188 = vadd.f32 %v48, %v187
    %v189 = vpop.f32.mrb[0].mxu0
    %190 = vmatprep.mubr.bf16.mxu0 0
    %191 = vmatmul.mubr.bf16.gmra.mrb[0].mxu0 %v116
    %v192 = vpop.f32.mrb[0].mxu0
    %v193 = vadd.f32 %v48, %v192
    %v194 = vpop.f32.mrb[0].mxu0
    %v195 = vpop.f32.mrb[0].mxu0
    %v196 = vadd.f32 %v48, %v195
    %v197 = vpop.f32.mrb[0].mxu0
    %198 = vmatprep.mubr.bf16.mxu0 0
    %199 = vmatmul.mubr.bf16.gmra.mrb[0].mxu0 %v119
    %v200 = vpop.f32.mrb[0].mxu0
    %v201 = vadd.f32 %v48, %v200
    %v202 = vpop.f32.mrb[0].mxu0
    %v203 = vpop.f32.mrb[0].mxu0
    %v204 = vadd.f32 %v48, %v203
    %v205 = vpop.f32.mrb[0].mxu0
    %206 = vmatprep.mubr.bf16.mxu0 0
    %207 = vmatmul.mubr.bf16.gmra.mrb[0].mxu0 %v122
    %v208 = vpop.f32.mrb[0].mxu0
    %v209 = vadd.f32 %v48, %v208
    %v210 = vpop.f32.mrb[0].mxu0
    %v211 = vpop.f32.mrb[0].mxu0
    %v212 = vadd.f32 %v48, %v211
    %v213 = vpop.f32.mrb[0].mxu0
    %214 = vmatprep.mubr.bf16.mxu0 0
    %215 = vmatmul.mubr.bf16.gmra.mrb[0].mxu0 %v125
    %v216 = vpop.f32.mrb[0].mxu0
    %v217 = vadd.f32 %v48, %v216
    %v218 = vpop.f32.mrb[0].mxu0
    %v219 = vpop.f32.mrb[0].mxu0
    %v220 = vadd.f32 %v48, %v219
    %v221 = vpop.f32.mrb[0].mxu0
    %222 = vmatprep.mubr.bf16.mxu0 0
    %223 = vmatmul.mubr.bf16.gmra.mrb[0].mxu0 %v128
    %v224 = vpop.f32.mrb[0].mxu0
    %v225 = vadd.f32 %v48, %v224
    %v226 = vpop.f32.mrb[0].mxu0
    %v227 = vpop.f32.mrb[0].mxu0
    %v228 = vadd.f32 %v48, %v227
    %v229 = vpop.f32.mrb[0].mxu0
    %230 = vdwg.mxu0
    %v231 = vld [vmem:[%s1] sm:$0xff]
    %v232 = vld [vmem:[%s1 + $0x8] sm:$0xff]
    %233 = vst [vmem:[#allocation2] sm:$0xff] %v231
    %234 = vst [vmem:[#allocation2 + $0x8] sm:$0xff] %v232
    %v235 = vld [vmem:[%s4] sm:$0xf]
    %v236 = vld [vmem:[%s4 + $0x4] sm:$0xf]
    %v237 = vld [vmem:[%s4 + $0x8] sm:$0xf]
    %v238 = vld [vmem:[%s4 + $0xc] sm:$0xf]
    %v239 = vld [vmem:[%s4 + $0x10] sm:$0xf]
    %v240 = vld [vmem:[%s4 + $0x14] sm:$0xf]
    %v241 = vld [vmem:[%s4 + $0x18] sm:$0xf]
    %v242 = vld [vmem:[%s4 + $0x1c] sm:$0xf]
    %v243 = vld [vmem:[%s4 + $0x20] sm:$0xf]
    %v244 = vld [vmem:[%s4 + $0x24] sm:$0xf]
    %v245 = vld [vmem:[%s4 + $0x28] sm:$0xf]
    %v246 = vld [vmem:[%s4 + $0x2c] sm:$0xf]
    %v247 = vld [vmem:[%s4 + $0x30] sm:$0xf]
    %v248 = vld [vmem:[%s4 + $0x34] sm:$0xf]
    %v249 = vld [vmem:[%s4 + $0x38] sm:$0xf]
    %v250 = vld [vmem:[%s4 + $0x3c] sm:$0xf]
    %v251 = vld [vmem:[#allocation2] sm:$0xff]
    %v252 = vld [vmem:[#allocation2 + $0x8] sm:$0xff]
    %v253 = vmul.f32 %v251, %v251
    %v254 = vmul.f32 %v252, %v252
    %257 = vrot.lane.b32.xlu0 %v253, 12
    %v258 = vpop.permute.xlu0 %257
    %259 = vrot.lane.b32.xlu0 %v254, 12
    %v260 = vpop.permute.xlu0 %259
    %vm263 = vcmask 458080
    %264 = vst.msk [vmem:[#allocation2] sm:$0xff] %vm263, %v258
    %265 = vst.msk [vmem:[#allocation2 + $0x8] sm:$0xff] %vm263, %v260
    %v266 = vld [vmem:[#allocation2] sm:$0xff]
    %v267 = vld [vmem:[#allocation2 + $0x8] sm:$0xff]
    %v268 = vpack.c.bf16 %v267, %v266
    %v285 = vunpack.c.l.b16 %v235
    %v286 = vunpack.c.l.b16 %v236
    %v287 = vunpack.c.l.b16 %v237
    %v288 = vunpack.c.l.b16 %v238
    %v289 = vunpack.c.l.b16 %v239
    %v290 = vunpack.c.l.b16 %v240
    %v291 = vunpack.c.l.b16 %v241
    %v292 = vunpack.c.l.b16 %v242
    %v293 = vunpack.c.l.b16 %v243
    %v294 = vunpack.c.l.b16 %v244
    %v295 = vunpack.c.l.b16 %v245
    %v296 = vunpack.c.l.b16 %v246
    %v297 = vunpack.c.l.b16 %v247
    %v298 = vunpack.c.l.b16 %v248
    %v299 = vunpack.c.l.b16 %v249
    %v300 = vunpack.c.l.b16 %v250
    %v301 = vpack.c.b16 %v286, %v285
    %v302 = vpack.c.b16 %v288, %v287
    %v303 = vpack.c.b16 %v290, %v289
    %v304 = vpack.c.b16 %v292, %v291
    %v305 = vpack.c.b16 %v294, %v293
    %v306 = vpack.c.b16 %v296, %v295
    %v307 = vpack.c.b16 %v298, %v297
    %v308 = vpack.c.b16 %v300, %v299
    %317 = vmatprep.subr.bf16.mxu0 0
    %318 = vmatpush1.bf16.msra.mxu0 %v301
    %319 = vmatprep.subr.bf16.mxu0 0
    %320 = vmatpush1.bf16.msra.mxu0 %v302
    %321 = vmatprep.subr.bf16.mxu0 0
    %322 = vmatpush1.bf16.msra.mxu0 %v303
    %323 = vmatprep.subr.bf16.mxu0 0
    %324 = vmatpush1.bf16.msra.mxu0 %v304
    %325 = vmatprep.subr.bf16.mxu0 0
    %326 = vmatpush1.bf16.msra.mxu0 %v305
    %327 = vmatprep.subr.bf16.mxu0 0
    %328 = vmatpush1.bf16.msra.mxu0 %v306
    %329 = vmatprep.subr.bf16.mxu0 0
    %330 = vmatpush1.bf16.msra.mxu0 %v307
    %331 = vmatprep.subr.bf16.mxu0 0
    %332 = vmatpush1.bf16.msra.mxu0 %v308
    %333 = vmatprep.subr.bf16.mxu0 0
    %334 = vmatpush1.bf16.msra.mxu0 0
    %335 = vmatprep.subr.bf16.mxu0 0
    %336 = vmatpush1.bf16.msra.mxu0 0
    %337 = vmatprep.subr.bf16.mxu0 0
    %338 = vmatpush1.bf16.msra.mxu0 0
    %339 = vmatprep.subr.bf16.mxu0 0
    %340 = vmatpush1.bf16.msra.mxu0 0
    %341 = vmatprep.subr.bf16.mxu0 0
    %342 = vmatpush1.bf16.msra.mxu0 0
    %343 = vmatprep.subr.bf16.mxu0 0
    %344 = vmatpush1.bf16.msra.mxu0 0
    %345 = vmatprep.subr.bf16.mxu0 0
    %346 = vmatpush1.bf16.msra.mxu0 0
    %347 = vmatprep.subr.bf16.mxu0 0
    %348 = vmatpush1.bf16.msra.mxu0 0
    %349 = vmatprep.mubr.bf16.mxu0 0
    %350 = vmatmul.mubr.bf16.gmra.mrb[0].mxu0 %v268
    %v351 = vpop.f32.mrb[0].mxu0
    %v352 = vadd.f32 0.0, %v351
    %v353 = vpop.f32.mrb[0].mxu0
    %v354 = vpop.f32.mrb[0].mxu0
    %v355 = vadd.f32 0.0, %v354
    %v356 = vpop.f32.mrb[0].mxu0
    %357 = vdwg.mxu0
    %v358 = vadd.f32 %v352, %v169
    %v359 = vadd.f32 %v355, %v172
    %v360 = vtanh.pop %v358
    %v361 = vtanh.pop %v359
    %v362 = vxor.u32 %v358, 2147483648
    %v363 = vxor.u32 %v359, 2147483648
    %v364 = vmul.f32 %v362, 1.442695
    %v365 = vpow.pop %v364
    %v366 = vmul.f32 %v363, 1.442695
    %v367 = vpow.pop %v366
    %v368 = vadd.f32 %v365, 1.0
    %v369 = vadd.f32 %v367, 1.0
    %v370 = vrcp.pop %v368
    %v371 = vmul.f32 1.0, %v370
    %v372 = vrcp.pop %v369
    %v373 = vmul.f32 1.0, %v372
    %376 = vrot.lane.b32.xlu0 %v352, 104
    %v377 = vpop.permute.xlu0 %376
    %378 = vrot.lane.b32.xlu0 %v355, 104
    %v379 = vpop.permute.xlu0 %378
    %v382 = vmul.f32 %v371, %v377
    %v383 = vmul.f32 %v373, %v379
    %386 = vrot.lane.b32.xlu0 %v169, 116
    %v387 = vpop.permute.xlu0 %386
    %388 = vrot.lane.b32.xlu0 %v172, 116
    %v389 = vpop.permute.xlu0 %388
    %v392 = vmul.f32 %v360, %v387
    %v393 = vmul.f32 %v361, %v389
    %396 = vrot.lane.b32.xlu0 %v392, 116
    %v397 = vpop.permute.xlu0 %396
    %398 = vrot.lane.b32.xlu0 %v393, 116
    %v399 = vpop.permute.xlu0 %398
    %v402 = vadd.f32 %v382, %v397
    %v403 = vadd.f32 %v383, %v399
    %vm404 = vcmask 261120
    %405 = vst.msk [vmem:[#allocation2] sm:$0xff] %vm404, %v360
    %406 = vst.msk [vmem:[#allocation2 + $0x8] sm:$0xff] %vm404, %v361
    %vm407 = vcmask 359680
    %408 = vst.msk [vmem:[#allocation2] sm:$0xff] %vm407, %v402
    %409 = vst.msk [vmem:[#allocation2 + $0x8] sm:$0xff] %vm407, %v403
    %v410 = vld [vmem:[#allocation2] sm:$0xff]
    %v411 = vld [vmem:[#allocation2 + $0x8] sm:$0xff]
    %412 = vst [vmem:[#allocation3] sm:$0xff] %v410
    %413 = vst [vmem:[#allocation3 + $0x8] sm:$0xff] %v411
    %v414 = vld [vmem:[#allocation2] sm:$0xff]
    %v415 = vld [vmem:[#allocation2 + $0x8] sm:$0xff]
    %v416 = vmul.f32 %v414, %v414
    %v417 = vmul.f32 %v415, %v415
    %420 = vrot.lane.b32.xlu0 %v416, 12
    %v421 = vpop.permute.xlu0 %420
    %422 = vrot.lane.b32.xlu0 %v417, 12
    %v423 = vpop.permute.xlu0 %422
    %426 = vst.msk [vmem:[#allocation2] sm:$0xff] %vm263, %v421
    %427 = vst.msk [vmem:[#allocation2 + $0x8] sm:$0xff] %vm263, %v423
    %v428 = vld [vmem:[#allocation2] sm:$0xff]
    %v429 = vld [vmem:[#allocation2 + $0x8] sm:$0xff]
    %v430 = vpack.c.bf16 %v429, %v428
    %431 = vmatprep.subr.bf16.mxu0 0
    %432 = vmatpush1.bf16.msra.mxu0 %v301
    %433 = vmatprep.subr.bf16.mxu0 0
    %434 = vmatpush1.bf16.msra.mxu0 %v302
    %435 = vmatprep.subr.bf16.mxu0 0
    %436 = vmatpush1.bf16.msra.mxu0 %v303
    %437 = vmatprep.subr.bf16.mxu0 0
    %438 = vmatpush1.bf16.msra.mxu0 %v304
    %439 = vmatprep.subr.bf16.mxu0 0
    %440 = vmatpush1.bf16.msra.mxu0 %v305
    %441 = vmatprep.subr.bf16.mxu0 0
    %442 = vmatpush1.bf16.msra.mxu0 %v306
    %443 = vmatprep.subr.bf16.mxu0 0
    %444 = vmatpush1.bf16.msra.mxu0 %v307
    %445 = vmatprep.subr.bf16.mxu0 0
    %446 = vmatpush1.bf16.msra.mxu0 %v308
    %447 = vmatprep.subr.bf16.mxu0 0
    %448 = vmatpush1.bf16.msra.mxu0 0
    %449 = vmatprep.subr.bf16.mxu0 0
    %450 = vmatpush1.bf16.msra.mxu0 0
    %451 = vmatprep.subr.bf16.mxu0 0
    %452 = vmatpush1.bf16.msra.mxu0 0
    %453 = vmatprep.subr.bf16.mxu0 0
    %454 = vmatpush1.bf16.msra.mxu0 0
    %455 = vmatprep.subr.bf16.mxu0 0
    %456 = vmatpush1.bf16.msra.mxu0 0
    %457 = vmatprep.subr.bf16.mxu0 0
    %458 = vmatpush1.bf16.msra.mxu0 0
    %459 = vmatprep.subr.bf16.mxu0 0
    %460 = vmatpush1.bf16.msra.mxu0 0
    %461 = vmatprep.subr.bf16.mxu0 0
    %462 = vmatpush1.bf16.msra.mxu0 0
    %463 = vmatprep.mubr.bf16.mxu0 0
    %464 = vmatmul.mubr.bf16.gmra.mrb[0].mxu0 %v430
    %v465 = vpop.f32.mrb[0].mxu0
    %v466 = vadd.f32 0.0, %v465
    %v467 = vpop.f32.mrb[0].mxu0
    %v468 = vpop.f32.mrb[0].mxu0
    %v469 = vadd.f32 0.0, %v468
    %v470 = vpop.f32.mrb[0].mxu0
    %471 = vdwg.mxu0
    %v472 = vadd.f32 %v466, %v177
    %v473 = vadd.f32 %v469, %v180
    %v474 = vtanh.pop %v472
    %v475 = vtanh.pop %v473
    %v476 = vxor.u32 %v472, 2147483648
    %v477 = vxor.u32 %v473, 2147483648
    %v478 = vmul.f32 %v476, 1.442695
    %v479 = vpow.pop %v478
    %v480 = vmul.f32 %v477, 1.442695
    %v481 = vpow.pop %v480
    %v482 = vadd.f32 %v479, 1.0
    %v483 = vadd.f32 %v481, 1.0
    %v484 = vrcp.pop %v482
    %v485 = vmul.f32 1.0, %v484
    %v486 = vrcp.pop %v483
    %v487 = vmul.f32 1.0, %v486
    %490 = vrot.lane.b32.xlu0 %v466, 104
    %v491 = vpop.permute.xlu0 %490
    %492 = vrot.lane.b32.xlu0 %v469, 104
    %v493 = vpop.permute.xlu0 %492
    %v496 = vmul.f32 %v485, %v491
    %v497 = vmul.f32 %v487, %v493
    %500 = vrot.lane.b32.xlu0 %v177, 116
    %v501 = vpop.permute.xlu0 %500
    %502 = vrot.lane.b32.xlu0 %v180, 116
    %v503 = vpop.permute.xlu0 %502
    %v506 = vmul.f32 %v474, %v501
    %v507 = vmul.f32 %v475, %v503
    %510 = vrot.lane.b32.xlu0 %v506, 116
    %v511 = vpop.permute.xlu0 %510
    %512 = vrot.lane.b32.xlu0 %v507, 116
    %v513 = vpop.permute.xlu0 %512
    %v516 = vadd.f32 %v496, %v511
    %v517 = vadd.f32 %v497, %v513
    %518 = vst.msk [vmem:[#allocation2] sm:$0xff] %vm404, %v474
    %519 = vst.msk [vmem:[#allocation2 + $0x8] sm:$0xff] %vm404, %v475
    %520 = vst.msk [vmem:[#allocation2] sm:$0xff] %vm407, %v516
    %521 = vst.msk [vmem:[#allocation2 + $0x8] sm:$0xff] %vm407, %v517
    %v522 = vld [vmem:[#allocation2] sm:$0xff]
    %v523 = vld [vmem:[#allocation2 + $0x8] sm:$0xff]
    %s524 = scalar_lea.vmem [#allocation3], 16
    %525 = vst [vmem:[%s524] sm:$0xff] %v522
    %526 = vst [vmem:[%s524 + $0x8] sm:$0xff] %v523
    %v527 = vld [vmem:[#allocation2] sm:$0xff]
    %v528 = vld [vmem:[#allocation2 + $0x8] sm:$0xff]
    %v529 = vmul.f32 %v527, %v527
    %v530 = vmul.f32 %v528, %v528
    %533 = vrot.lane.b32.xlu0 %v529, 12
    %v534 = vpop.permute.xlu0 %533
    %535 = vrot.lane.b32.xlu0 %v530, 12
    %v536 = vpop.permute.xlu0 %535
    %539 = vst.msk [vmem:[#allocation2] sm:$0xff] %vm263, %v534
    %540 = vst.msk [vmem:[#allocation2 + $0x8] sm:$0xff] %vm263, %v536
    %v541 = vld [vmem:[#allocation2] sm:$0xff]
    %v542 = vld [vmem:[#allocation2 + $0x8] sm:$0xff]
    %v543 = vpack.c.bf16 %v542, %v541
    %544 = vmatprep.subr.bf16.mxu0 0
    %545 = vmatpush1.bf16.msra.mxu0 %v301
    %546 = vmatprep.subr.bf16.mxu0 0
    %547 = vmatpush1.bf16.msra.mxu0 %v302
    %548 = vmatprep.subr.bf16.mxu0 0
    %549 = vmatpush1.bf16.msra.mxu0 %v303
    %550 = vmatprep.subr.bf16.mxu0 0
    %551 = vmatpush1.bf16.msra.mxu0 %v304
    %552 = vmatprep.subr.bf16.mxu0 0
    %553 = vmatpush1.bf16.msra.mxu0 %v305
    %554 = vmatprep.subr.bf16.mxu0 0
    %555 = vmatpush1.bf16.msra.mxu0 %v306
    %556 = vmatprep.subr.bf16.mxu0 0
    %557 = vmatpush1.bf16.msra.mxu0 %v307
    %558 = vmatprep.subr.bf16.mxu0 0
    %559 = vmatpush1.bf16.msra.mxu0 %v308
    %560 = vmatprep.subr.bf16.mxu0 0
    %561 = vmatpush1.bf16.msra.mxu0 0
    %562 = vmatprep.subr.bf16.mxu0 0
    %563 = vmatpush1.bf16.msra.mxu0 0
    %564 = vmatprep.subr.bf16.mxu0 0
    %565 = vmatpush1.bf16.msra.mxu0 0
    %566 = vmatprep.subr.bf16.mxu0 0
    %567 = vmatpush1.bf16.msra.mxu0 0
    %568 = vmatprep.subr.bf16.mxu0 0
    %569 = vmatpush1.bf16.msra.mxu0 0
    %570 = vmatprep.subr.bf16.mxu0 0
    %571 = vmatpush1.bf16.msra.mxu0 0
    %572 = vmatprep.subr.bf16.mxu0 0
    %573 = vmatpush1.bf16.msra.mxu0 0
    %574 = vmatprep.subr.bf16.mxu0 0
    %575 = vmatpush1.bf16.msra.mxu0 0
    %576 = vmatprep.mubr.bf16.mxu0 0
    %577 = vmatmul.mubr.bf16.gmra.mrb[0].mxu0 %v543
    %v578 = vpop.f32.mrb[0].mxu0
    %v579 = vadd.f32 0.0, %v578
    %v580 = vpop.f32.mrb[0].mxu0
    %v581 = vpop.f32.mrb[0].mxu0
    %v582 = vadd.f32 0.0, %v581
    %v583 = vpop.f32.mrb[0].mxu0
    %584 = vdwg.mxu0
    %v585 = vadd.f32 %v579, %v185
    %v586 = vadd.f32 %v582, %v188
    %v587 = vtanh.pop %v585
    %v588 = vtanh.pop %v586
    %v589 = vxor.u32 %v585, 2147483648
    %v590 = vxor.u32 %v586, 2147483648
    %v591 = vmul.f32 %v589, 1.442695
    %v592 = vpow.pop %v591
    %v593 = vmul.f32 %v590, 1.442695
    %v594 = vpow.pop %v593
    %v595 = vadd.f32 %v592, 1.0
    %v596 = vadd.f32 %v594, 1.0
    %v597 = vrcp.pop %v595
    %v598 = vmul.f32 1.0, %v597
    %v599 = vrcp.pop %v596
    %v600 = vmul.f32 1.0, %v599
    %603 = vrot.lane.b32.xlu0 %v579, 104
    %v604 = vpop.permute.xlu0 %603
    %605 = vrot.lane.b32.xlu0 %v582, 104
    %v606 = vpop.permute.xlu0 %605
    %v609 = vmul.f32 %v598, %v604
    %v610 = vmul.f32 %v600, %v606
    %613 = vrot.lane.b32.xlu0 %v185, 116
    %v614 = vpop.permute.xlu0 %613
    %615 = vrot.lane.b32.xlu0 %v188, 116
    %v616 = vpop.permute.xlu0 %615
    %v619 = vmul.f32 %v587, %v614
    %v620 = vmul.f32 %v588, %v616
    %623 = vrot.lane.b32.xlu0 %v619, 116
    %v624 = vpop.permute.xlu0 %623
    %625 = vrot.lane.b32.xlu0 %v620, 116
    %v626 = vpop.permute.xlu0 %625
    %v629 = vadd.f32 %v609, %v624
    %v630 = vadd.f32 %v610, %v626
    %631 = vst.msk [vmem:[#allocation2] sm:$0xff] %vm404, %v587
    %632 = vst.msk [vmem:[#allocation2 + $0x8] sm:$0xff] %vm404, %v588
    %633 = vst.msk [vmem:[#allocation2] sm:$0xff] %vm407, %v629
    %634 = vst.msk [vmem:[#allocation2 + $0x8] sm:$0xff] %vm407, %v630
    %v635 = vld [vmem:[#allocation2] sm:$0xff]
    %v636 = vld [vmem:[#allocation2 + $0x8] sm:$0xff]
    %s637 = scalar_lea.vmem [#allocation3], 32
    %638 = vst [vmem:[%s637] sm:$0xff] %v635
    %639 = vst [vmem:[%s637 + $0x8] sm:$0xff] %v636
    %v640 = vld [vmem:[#allocation2] sm:$0xff]
    %v641 = vld [vmem:[#allocation2 + $0x8] sm:$0xff]
    %v642 = vmul.f32 %v640, %v640
    %v643 = vmul.f32 %v641, %v641
    %646 = vrot.lane.b32.xlu0 %v642, 12
    %v647 = vpop.permute.xlu0 %646
    %648 = vrot.lane.b32.xlu0 %v643, 12
    %v649 = vpop.permute.xlu0 %648
    %652 = vst.msk [vmem:[#allocation2] sm:$0xff] %vm263, %v647
    %653 = vst.msk [vmem:[#allocation2 + $0x8] sm:$0xff] %vm263, %v649
    %v654 = vld [vmem:[#allocation2] sm:$0xff]
    %v655 = vld [vmem:[#allocation2 + $0x8] sm:$0xff]
    %v656 = vpack.c.bf16 %v655, %v654
    %657 = vmatprep.subr.bf16.mxu0 0
    %658 = vmatpush1.bf16.msra.mxu0 %v301
    %659 = vmatprep.subr.bf16.mxu0 0
    %660 = vmatpush1.bf16.msra.mxu0 %v302
    %661 = vmatprep.subr.bf16.mxu0 0
    %662 = vmatpush1.bf16.msra.mxu0 %v303
    %663 = vmatprep.subr.bf16.mxu0 0
    %664 = vmatpush1.bf16.msra.mxu0 %v304
    %665 = vmatprep.subr.bf16.mxu0 0
    %666 = vmatpush1.bf16.msra.mxu0 %v305
    %667 = vmatprep.subr.bf16.mxu0 0
    %668 = vmatpush1.bf16.msra.mxu0 %v306
    %669 = vmatprep.subr.bf16.mxu0 0
    %670 = vmatpush1.bf16.msra.mxu0 %v307
    %671 = vmatprep.subr.bf16.mxu0 0
    %672 = vmatpush1.bf16.msra.mxu0 %v308
    %673 = vmatprep.subr.bf16.mxu0 0
    %674 = vmatpush1.bf16.msra.mxu0 0
    %675 = vmatprep.subr.bf16.mxu0 0
    %676 = vmatpush1.bf16.msra.mxu0 0
    %677 = vmatprep.subr.bf16.mxu0 0
    %678 = vmatpush1.bf16.msra.mxu0 0
    %679 = vmatprep.subr.bf16.mxu0 0
    %680 = vmatpush1.bf16.msra.mxu0 0
    %681 = vmatprep.subr.bf16.mxu0 0
    %682 = vmatpush1.bf16.msra.mxu0 0
    %683 = vmatprep.subr.bf16.mxu0 0
    %684 = vmatpush1.bf16.msra.mxu0 0
    %685 = vmatprep.subr.bf16.mxu0 0
    %686 = vmatpush1.bf16.msra.mxu0 0
    %687 = vmatprep.subr.bf16.mxu0 0
    %688 = vmatpush1.bf16.msra.mxu0 0
    %689 = vmatprep.mubr.bf16.mxu0 0
    %690 = vmatmul.mubr.bf16.gmra.mrb[0].mxu0 %v656
    %v691 = vpop.f32.mrb[0].mxu0
    %v692 = vadd.f32 0.0, %v691
    %v693 = vpop.f32.mrb[0].mxu0
    %v694 = vpop.f32.mrb[0].mxu0
    %v695 = vadd.f32 0.0, %v694
    %v696 = vpop.f32.mrb[0].mxu0
    %697 = vdwg.mxu0
    %v698 = vadd.f32 %v692, %v193
    %v699 = vadd.f32 %v695, %v196
    %v700 = vtanh.pop %v698
    %v701 = vtanh.pop %v699
    %v702 = vxor.u32 %v698, 2147483648
    %v703 = vxor.u32 %v699, 2147483648
    %v704 = vmul.f32 %v702, 1.442695
    %v705 = vpow.pop %v704
    %v706 = vmul.f32 %v703, 1.442695
    %v707 = vpow.pop %v706
    %v708 = vadd.f32 %v705, 1.0
    %v709 = vadd.f32 %v707, 1.0
    %v710 = vrcp.pop %v708
    %v711 = vmul.f32 1.0, %v710
    %v712 = vrcp.pop %v709
    %v713 = vmul.f32 1.0, %v712
    %716 = vrot.lane.b32.xlu0 %v692, 104
    %v717 = vpop.permute.xlu0 %716
    %718 = vrot.lane.b32.xlu0 %v695, 104
    %v719 = vpop.permute.xlu0 %718
    %v722 = vmul.f32 %v711, %v717
    %v723 = vmul.f32 %v713, %v719
    %726 = vrot.lane.b32.xlu0 %v193, 116
    %v727 = vpop.permute.xlu0 %726
    %728 = vrot.lane.b32.xlu0 %v196, 116
    %v729 = vpop.permute.xlu0 %728
    %v732 = vmul.f32 %v700, %v727
    %v733 = vmul.f32 %v701, %v729
    %736 = vrot.lane.b32.xlu0 %v732, 116
    %v737 = vpop.permute.xlu0 %736
    %738 = vrot.lane.b32.xlu0 %v733, 116
    %v739 = vpop.permute.xlu0 %738
    %v742 = vadd.f32 %v722, %v737
    %v743 = vadd.f32 %v723, %v739
    %744 = vst.msk [vmem:[#allocation2] sm:$0xff] %vm404, %v700
    %745 = vst.msk [vmem:[#allocation2 + $0x8] sm:$0xff] %vm404, %v701
    %746 = vst.msk [vmem:[#allocation2] sm:$0xff] %vm407, %v742
    %747 = vst.msk [vmem:[#allocation2 + $0x8] sm:$0xff] %vm407, %v743
    %v748 = vld [vmem:[#allocation2] sm:$0xff]
    %v749 = vld [vmem:[#allocation2 + $0x8] sm:$0xff]
    %s750 = scalar_lea.vmem [#allocation3], 48
    %751 = vst [vmem:[%s750] sm:$0xff] %v748
    %752 = vst [vmem:[%s750 + $0x8] sm:$0xff] %v749
    %v753 = vld [vmem:[#allocation2] sm:$0xff]
    %v754 = vld [vmem:[#allocation2 + $0x8] sm:$0xff]
    %v755 = vmul.f32 %v753, %v753
    %v756 = vmul.f32 %v754, %v754
    %759 = vrot.lane.b32.xlu0 %v755, 12
    %v760 = vpop.permute.xlu0 %759
    %761 = vrot.lane.b32.xlu0 %v756, 12
    %v762 = vpop.permute.xlu0 %761
    %765 = vst.msk [vmem:[#allocation2] sm:$0xff] %vm263, %v760
    %766 = vst.msk [vmem:[#allocation2 + $0x8] sm:$0xff] %vm263, %v762
    %v767 = vld [vmem:[#allocation2] sm:$0xff]
    %v768 = vld [vmem:[#allocation2 + $0x8] sm:$0xff]
    %v769 = vpack.c.bf16 %v768, %v767
    %770 = vmatprep.subr.bf16.mxu0 0
    %771 = vmatpush1.bf16.msra.mxu0 %v301
    %772 = vmatprep.subr.bf16.mxu0 0
    %773 = vmatpush1.bf16.msra.mxu0 %v302
    %774 = vmatprep.subr.bf16.mxu0 0
    %775 = vmatpush1.bf16.msra.mxu0 %v303
    %776 = vmatprep.subr.bf16.mxu0 0
    %777 = vmatpush1.bf16.msra.mxu0 %v304
    %778 = vmatprep.subr.bf16.mxu0 0
    %779 = vmatpush1.bf16.msra.mxu0 %v305
    %780 = vmatprep.subr.bf16.mxu0 0
    %781 = vmatpush1.bf16.msra.mxu0 %v306
    %782 = vmatprep.subr.bf16.mxu0 0
    %783 = vmatpush1.bf16.msra.mxu0 %v307
    %784 = vmatprep.subr.bf16.mxu0 0
    %785 = vmatpush1.bf16.msra.mxu0 %v308
    %786 = vmatprep.subr.bf16.mxu0 0
    %787 = vmatpush1.bf16.msra.mxu0 0
    %788 = vmatprep.subr.bf16.mxu0 0
    %789 = vmatpush1.bf16.msra.mxu0 0
    %790 = vmatprep.subr.bf16.mxu0 0
    %791 = vmatpush1.bf16.msra.mxu0 0
    %792 = vmatprep.subr.bf16.mxu0 0
    %793 = vmatpush1.bf16.msra.mxu0 0
    %794 = vmatprep.subr.bf16.mxu0 0
    %795 = vmatpush1.bf16.msra.mxu0 0
    %796 = vmatprep.subr.bf16.mxu0 0
    %797 = vmatpush1.bf16.msra.mxu0 0
    %798 = vmatprep.subr.bf16.mxu0 0
    %799 = vmatpush1.bf16.msra.mxu0 0
    %800 = vmatprep.subr.bf16.mxu0 0
    %801 = vmatpush1.bf16.msra.mxu0 0
    %802 = vmatprep.mubr.bf16.mxu0 0
    %803 = vmatmul.mubr.bf16.gmra.mrb[0].mxu0 %v769
    %v804 = vpop.f32.mrb[0].mxu0
    %v805 = vadd.f32 0.0, %v804
    %v806 = vpop.f32.mrb[0].mxu0
    %v807 = vpop.f32.mrb[0].mxu0
    %v808 = vadd.f32 0.0, %v807
    %v809 = vpop.f32.mrb[0].mxu0
    %810 = vdwg.mxu0
    %v811 = vadd.f32 %v805, %v201
    %v812 = vadd.f32 %v808, %v204
    %v813 = vtanh.pop %v811
    %v814 = vtanh.pop %v812
    %v815 = vxor.u32 %v811, 2147483648
    %v816 = vxor.u32 %v812, 2147483648
    %v817 = vmul.f32 %v815, 1.442695
    %v818 = vpow.pop %v817
    %v819 = vmul.f32 %v816, 1.442695
    %v820 = vpow.pop %v819
    %v821 = vadd.f32 %v818, 1.0
    %v822 = vadd.f32 %v820, 1.0
    %v823 = vrcp.pop %v821
    %v824 = vmul.f32 1.0, %v823
    %v825 = vrcp.pop %v822
    %v826 = vmul.f32 1.0, %v825
    %829 = vrot.lane.b32.xlu0 %v805, 104
    %v830 = vpop.permute.xlu0 %829
    %831 = vrot.lane.b32.xlu0 %v808, 104
    %v832 = vpop.permute.xlu0 %831
    %v835 = vmul.f32 %v824, %v830
    %v836 = vmul.f32 %v826, %v832
    %839 = vrot.lane.b32.xlu0 %v201, 116
    %v840 = vpop.permute.xlu0 %839
    %841 = vrot.lane.b32.xlu0 %v204, 116
    %v842 = vpop.permute.xlu0 %841
    %v845 = vmul.f32 %v813, %v840
    %v846 = vmul.f32 %v814, %v842
    %849 = vrot.lane.b32.xlu0 %v845, 116
    %v850 = vpop.permute.xlu0 %849
    %851 = vrot.lane.b32.xlu0 %v846, 116
    %v852 = vpop.permute.xlu0 %851
    %v855 = vadd.f32 %v835, %v850
    %v856 = vadd.f32 %v836, %v852
    %857 = vst.msk [vmem:[#allocation2] sm:$0xff] %vm404, %v813
    %858 = vst.msk [vmem:[#allocation2 + $0x8] sm:$0xff] %vm404, %v814
    %859 = vst.msk [vmem:[#allocation2] sm:$0xff] %vm407, %v855
    %860 = vst.msk [vmem:[#allocation2 + $0x8] sm:$0xff] %vm407, %v856
    %v861 = vld [vmem:[#allocation2] sm:$0xff]
    %v862 = vld [vmem:[#allocation2 + $0x8] sm:$0xff]
    %s863 = scalar_lea.vmem [#allocation3], 64
    %864 = vst [vmem:[%s863] sm:$0xff] %v861
    %865 = vst [vmem:[%s863 + $0x8] sm:$0xff] %v862
    %v866 = vld [vmem:[#allocation2] sm:$0xff]
    %v867 = vld [vmem:[#allocation2 + $0x8] sm:$0xff]
    %v868 = vmul.f32 %v866, %v866
    %v869 = vmul.f32 %v867, %v867
    %872 = vrot.lane.b32.xlu0 %v868, 12
    %v873 = vpop.permute.xlu0 %872
    %874 = vrot.lane.b32.xlu0 %v869, 12
    %v875 = vpop.permute.xlu0 %874
    %878 = vst.msk [vmem:[#allocation2] sm:$0xff] %vm263, %v873
    %879 = vst.msk [vmem:[#allocation2 + $0x8] sm:$0xff] %vm263, %v875
    %v880 = vld [vmem:[#allocation2] sm:$0xff]
    %v881 = vld [vmem:[#allocation2 + $0x8] sm:$0xff]
    %v882 = vpack.c.bf16 %v881, %v880
    %883 = vmatprep.subr.bf16.mxu0 0
    %884 = vmatpush1.bf16.msra.mxu0 %v301
    %885 = vmatprep.subr.bf16.mxu0 0
    %886 = vmatpush1.bf16.msra.mxu0 %v302
    %887 = vmatprep.subr.bf16.mxu0 0
    %888 = vmatpush1.bf16.msra.mxu0 %v303
    %889 = vmatprep.subr.bf16.mxu0 0
    %890 = vmatpush1.bf16.msra.mxu0 %v304
    %891 = vmatprep.subr.bf16.mxu0 0
    %892 = vmatpush1.bf16.msra.mxu0 %v305
    %893 = vmatprep.subr.bf16.mxu0 0
    %894 = vmatpush1.bf16.msra.mxu0 %v306
    %895 = vmatprep.subr.bf16.mxu0 0
    %896 = vmatpush1.bf16.msra.mxu0 %v307
    %897 = vmatprep.subr.bf16.mxu0 0
    %898 = vmatpush1.bf16.msra.mxu0 %v308
    %899 = vmatprep.subr.bf16.mxu0 0
    %900 = vmatpush1.bf16.msra.mxu0 0
    %901 = vmatprep.subr.bf16.mxu0 0
    %902 = vmatpush1.bf16.msra.mxu0 0
    %903 = vmatprep.subr.bf16.mxu0 0
    %904 = vmatpush1.bf16.msra.mxu0 0
    %905 = vmatprep.subr.bf16.mxu0 0
    %906 = vmatpush1.bf16.msra.mxu0 0
    %907 = vmatprep.subr.bf16.mxu0 0
    %908 = vmatpush1.bf16.msra.mxu0 0
    %909 = vmatprep.subr.bf16.mxu0 0
    %910 = vmatpush1.bf16.msra.mxu0 0
    %911 = vmatprep.subr.bf16.mxu0 0
    %912 = vmatpush1.bf16.msra.mxu0 0
    %913 = vmatprep.subr.bf16.mxu0 0
    %914 = vmatpush1.bf16.msra.mxu0 0
    %915 = vmatprep.mubr.bf16.mxu0 0
    %916 = vmatmul.mubr.bf16.gmra.mrb[0].mxu0 %v882
    %v917 = vpop.f32.mrb[0].mxu0
    %v918 = vadd.f32 0.0, %v917
    %v919 = vpop.f32.mrb[0].mxu0
    %v920 = vpop.f32.mrb[0].mxu0
    %v921 = vadd.f32 0.0, %v920
    %v922 = vpop.f32.mrb[0].mxu0
    %923 = vdwg.mxu0
    %v924 = vadd.f32 %v918, %v209
    %v925 = vadd.f32 %v921, %v212
    %v926 = vtanh.pop %v924
    %v927 = vtanh.pop %v925
    %v928 = vxor.u32 %v924, 2147483648
    %v929 = vxor.u32 %v925, 2147483648
    %v930 = vmul.f32 %v928, 1.442695
    %v931 = vpow.pop %v930
    %v932 = vmul.f32 %v929, 1.442695
    %v933 = vpow.pop %v932
    %v934 = vadd.f32 %v931, 1.0
    %v935 = vadd.f32 %v933, 1.0
    %v936 = vrcp.pop %v934
    %v937 = vmul.f32 1.0, %v936
    %v938 = vrcp.pop %v935
    %v939 = vmul.f32 1.0, %v938
    %942 = vrot.lane.b32.xlu0 %v918, 104
    %v943 = vpop.permute.xlu0 %942
    %944 = vrot.lane.b32.xlu0 %v921, 104
    %v945 = vpop.permute.xlu0 %944
    %v948 = vmul.f32 %v937, %v943
    %v949 = vmul.f32 %v939, %v945
    %952 = vrot.lane.b32.xlu0 %v209, 116
    %v953 = vpop.permute.xlu0 %952
    %954 = vrot.lane.b32.xlu0 %v212, 116
    %v955 = vpop.permute.xlu0 %954
    %v958 = vmul.f32 %v926, %v953
    %v959 = vmul.f32 %v927, %v955
    %962 = vrot.lane.b32.xlu0 %v958, 116
    %v963 = vpop.permute.xlu0 %962
    %964 = vrot.lane.b32.xlu0 %v959, 116
    %v965 = vpop.permute.xlu0 %964
    %v968 = vadd.f32 %v948, %v963
    %v969 = vadd.f32 %v949, %v965
    %970 = vst.msk [vmem:[#allocation2] sm:$0xff] %vm404, %v926
    %971 = vst.msk [vmem:[#allocation2 + $0x8] sm:$0xff] %vm404, %v927
    %972 = vst.msk [vmem:[#allocation2] sm:$0xff] %vm407, %v968
    %973 = vst.msk [vmem:[#allocation2 + $0x8] sm:$0xff] %vm407, %v969
    %v974 = vld [vmem:[#allocation2] sm:$0xff]
    %v975 = vld [vmem:[#allocation2 + $0x8] sm:$0xff]
    %s976 = scalar_lea.vmem [#allocation3], 80
    %977 = vst [vmem:[%s976] sm:$0xff] %v974
    %978 = vst [vmem:[%s976 + $0x8] sm:$0xff] %v975
    %v979 = vld [vmem:[#allocation2] sm:$0xff]
    %v980 = vld [vmem:[#allocation2 + $0x8] sm:$0xff]
    %v981 = vmul.f32 %v979, %v979
    %v982 = vmul.f32 %v980, %v980
    %985 = vrot.lane.b32.xlu0 %v981, 12
    %v986 = vpop.permute.xlu0 %985
    %987 = vrot.lane.b32.xlu0 %v982, 12
    %v988 = vpop.permute.xlu0 %987
    %991 = vst.msk [vmem:[#allocation2] sm:$0xff] %vm263, %v986
    %992 = vst.msk [vmem:[#allocation2 + $0x8] sm:$0xff] %vm263, %v988
    %v993 = vld [vmem:[#allocation2] sm:$0xff]
    %v994 = vld [vmem:[#allocation2 + $0x8] sm:$0xff]
    %v995 = vpack.c.bf16 %v994, %v993
    %996 = vmatprep.subr.bf16.mxu0 0
    %997 = vmatpush1.bf16.msra.mxu0 %v301
    %998 = vmatprep.subr.bf16.mxu0 0
    %999 = vmatpush1.bf16.msra.mxu0 %v302
    %1000 = vmatprep.subr.bf16.mxu0 0
    %1001 = vmatpush1.bf16.msra.mxu0 %v303
    %1002 = vmatprep.subr.bf16.mxu0 0
    %1003 = vmatpush1.bf16.msra.mxu0 %v304
    %1004 = vmatprep.subr.bf16.mxu0 0
    %1005 = vmatpush1.bf16.msra.mxu0 %v305
    %1006 = vmatprep.subr.bf16.mxu0 0
    %1007 = vmatpush1.bf16.msra.mxu0 %v306
    %1008 = vmatprep.subr.bf16.mxu0 0
    %1009 = vmatpush1.bf16.msra.mxu0 %v307
    %1010 = vmatprep.subr.bf16.mxu0 0
    %1011 = vmatpush1.bf16.msra.mxu0 %v308
    %1012 = vmatprep.subr.bf16.mxu0 0
    %1013 = vmatpush1.bf16.msra.mxu0 0
    %1014 = vmatprep.subr.bf16.mxu0 0
    %1015 = vmatpush1.bf16.msra.mxu0 0
    %1016 = vmatprep.subr.bf16.mxu0 0
    %1017 = vmatpush1.bf16.msra.mxu0 0
    %1018 = vmatprep.subr.bf16.mxu0 0
    %1019 = vmatpush1.bf16.msra.mxu0 0
    %1020 = vmatprep.subr.bf16.mxu0 0
    %1021 = vmatpush1.bf16.msra.mxu0 0
    %1022 = vmatprep.subr.bf16.mxu0 0
    %1023 = vmatpush1.bf16.msra.mxu0 0
    %1024 = vmatprep.subr.bf16.mxu0 0
    %1025 = vmatpush1.bf16.msra.mxu0 0
    %1026 = vmatprep.subr.bf16.mxu0 0
    %1027 = vmatpush1.bf16.msra.mxu0 0
    %1028 = vmatprep.mubr.bf16.mxu0 0
    %1029 = vmatmul.mubr.bf16.gmra.mrb[0].mxu0 %v995
    %v1030 = vpop.f32.mrb[0].mxu0
    %v1031 = vadd.f32 0.0, %v1030
    %v1032 = vpop.f32.mrb[0].mxu0
    %v1033 = vpop.f32.mrb[0].mxu0
    %v1034 = vadd.f32 0.0, %v1033
    %v1035 = vpop.f32.mrb[0].mxu0
    %1036 = vdwg.mxu0
    %v1037 = vadd.f32 %v1031, %v217
    %v1038 = vadd.f32 %v1034, %v220
    %v1039 = vtanh.pop %v1037
    %v1040 = vtanh.pop %v1038
    %v1041 = vxor.u32 %v1037, 2147483648
    %v1042 = vxor.u32 %v1038, 2147483648
    %v1043 = vmul.f32 %v1041, 1.442695
    %v1044 = vpow.pop %v1043
    %v1045 = vmul.f32 %v1042, 1.442695
    %v1046 = vpow.pop %v1045
    %v1047 = vadd.f32 %v1044, 1.0
    %v1048 = vadd.f32 %v1046, 1.0
    %v1049 = vrcp.pop %v1047
    %v1050 = vmul.f32 1.0, %v1049
    %v1051 = vrcp.pop %v1048
    %v1052 = vmul.f32 1.0, %v1051
    %1055 = vrot.lane.b32.xlu0 %v1031, 104
    %v1056 = vpop.permute.xlu0 %1055
    %1057 = vrot.lane.b32.xlu0 %v1034, 104
    %v1058 = vpop.permute.xlu0 %1057
    %v1061 = vmul.f32 %v1050, %v1056
    %v1062 = vmul.f32 %v1052, %v1058
    %1065 = vrot.lane.b32.xlu0 %v217, 116
    %v1066 = vpop.permute.xlu0 %1065
    %1067 = vrot.lane.b32.xlu0 %v220, 116
    %v1068 = vpop.permute.xlu0 %1067
    %v1071 = vmul.f32 %v1039, %v1066
    %v1072 = vmul.f32 %v1040, %v1068
    %1075 = vrot.lane.b32.xlu0 %v1071, 116
    %v1076 = vpop.permute.xlu0 %1075
    %1077 = vrot.lane.b32.xlu0 %v1072, 116
    %v1078 = vpop.permute.xlu0 %1077
    %v1081 = vadd.f32 %v1061, %v1076
    %v1082 = vadd.f32 %v1062, %v1078
    %1083 = vst.msk [vmem:[#allocation2] sm:$0xff] %vm404, %v1039
    %1084 = vst.msk [vmem:[#allocation2 + $0x8] sm:$0xff] %vm404, %v1040
    %1085 = vst.msk [vmem:[#allocation2] sm:$0xff] %vm407, %v1081
    %1086 = vst.msk [vmem:[#allocation2 + $0x8] sm:$0xff] %vm407, %v1082
    %v1087 = vld [vmem:[#allocation2] sm:$0xff]
    %v1088 = vld [vmem:[#allocation2 + $0x8] sm:$0xff]
    %s1089 = scalar_lea.vmem [#allocation3], 96
    %1090 = vst [vmem:[%s1089] sm:$0xff] %v1087
    %1091 = vst [vmem:[%s1089 + $0x8] sm:$0xff] %v1088
    %v1092 = vld [vmem:[#allocation2] sm:$0xff]
    %v1093 = vld [vmem:[#allocation2 + $0x8] sm:$0xff]
    %v1094 = vmul.f32 %v1092, %v1092
    %v1095 = vmul.f32 %v1093, %v1093
    %1098 = vrot.lane.b32.xlu0 %v1094, 12
    %v1099 = vpop.permute.xlu0 %1098
    %1100 = vrot.lane.b32.xlu0 %v1095, 12
    %v1101 = vpop.permute.xlu0 %1100
    %1104 = vst.msk [vmem:[#allocation2] sm:$0xff] %vm263, %v1099
    %1105 = vst.msk [vmem:[#allocation2 + $0x8] sm:$0xff] %vm263, %v1101
    %v1106 = vld [vmem:[#allocation2] sm:$0xff]
    %v1107 = vld [vmem:[#allocation2 + $0x8] sm:$0xff]
    %v1108 = vpack.c.bf16 %v1107, %v1106
    %1109 = vmatprep.subr.bf16.mxu0 0
    %1110 = vmatpush1.bf16.msra.mxu0 %v301
    %1111 = vmatprep.subr.bf16.mxu0 0
    %1112 = vmatpush1.bf16.msra.mxu0 %v302
    %1113 = vmatprep.subr.bf16.mxu0 0
    %1114 = vmatpush1.bf16.msra.mxu0 %v303
    %1115 = vmatprep.subr.bf16.mxu0 0
    %1116 = vmatpush1.bf16.msra.mxu0 %v304
    %1117 = vmatprep.subr.bf16.mxu0 0
    %1118 = vmatpush1.bf16.msra.mxu0 %v305
    %1119 = vmatprep.subr.bf16.mxu0 0
    %1120 = vmatpush1.bf16.msra.mxu0 %v306
    %1121 = vmatprep.subr.bf16.mxu0 0
    %1122 = vmatpush1.bf16.msra.mxu0 %v307
    %1123 = vmatprep.subr.bf16.mxu0 0
    %1124 = vmatpush1.bf16.msra.mxu0 %v308
    %1125 = vmatprep.subr.bf16.mxu0 0
    %1126 = vmatpush1.bf16.msra.mxu0 0
    %1127 = vmatprep.subr.bf16.mxu0 0
    %1128 = vmatpush1.bf16.msra.mxu0 0
    %1129 = vmatprep.subr.bf16.mxu0 0
    %1130 = vmatpush1.bf16.msra.mxu0 0
    %1131 = vmatprep.subr.bf16.mxu0 0
    %1132 = vmatpush1.bf16.msra.mxu0 0
    %1133 = vmatprep.subr.bf16.mxu0 0
    %1134 = vmatpush1.bf16.msra.mxu0 0
    %1135 = vmatprep.subr.bf16.mxu0 0
    %1136 = vmatpush1.bf16.msra.mxu0 0
    %1137 = vmatprep.subr.bf16.mxu0 0
    %1138 = vmatpush1.bf16.msra.mxu0 0
    %1139 = vmatprep.subr.bf16.mxu0 0
    %1140 = vmatpush1.bf16.msra.mxu0 0
    %1141 = vmatprep.mubr.bf16.mxu0 0
    %1142 = vmatmul.mubr.bf16.gmra.mrb[0].mxu0 %v1108
    %v1143 = vpop.f32.mrb[0].mxu0
    %v1144 = vadd.f32 0.0, %v1143
    %v1145 = vpop.f32.mrb[0].mxu0
    %v1146 = vpop.f32.mrb[0].mxu0
    %v1147 = vadd.f32 0.0, %v1146
    %v1148 = vpop.f32.mrb[0].mxu0
    %1149 = vdwg.mxu0
    %v1150 = vadd.f32 %v1144, %v225
    %v1151 = vadd.f32 %v1147, %v228
    %v1152 = vtanh.pop %v1150
    %v1153 = vtanh.pop %v1151
    %v1154 = vxor.u32 %v1150, 2147483648
    %v1155 = vxor.u32 %v1151, 2147483648
    %v1156 = vmul.f32 %v1154, 1.442695
    %v1157 = vpow.pop %v1156
    %v1158 = vmul.f32 %v1155, 1.442695
    %v1159 = vpow.pop %v1158
    %v1160 = vadd.f32 %v1157, 1.0
    %v1161 = vadd.f32 %v1159, 1.0
    %v1162 = vrcp.pop %v1160
    %v1163 = vmul.f32 1.0, %v1162
    %v1164 = vrcp.pop %v1161
    %v1165 = vmul.f32 1.0, %v1164
    %1168 = vrot.lane.b32.xlu0 %v1144, 104
    %v1169 = vpop.permute.xlu0 %1168
    %1170 = vrot.lane.b32.xlu0 %v1147, 104
    %v1171 = vpop.permute.xlu0 %1170
    %v1174 = vmul.f32 %v1163, %v1169
    %v1175 = vmul.f32 %v1165, %v1171
    %1178 = vrot.lane.b32.xlu0 %v225, 116
    %v1179 = vpop.permute.xlu0 %1178
    %1180 = vrot.lane.b32.xlu0 %v228, 116
    %v1181 = vpop.permute.xlu0 %1180
    %v1184 = vmul.f32 %v1152, %v1179
    %v1185 = vmul.f32 %v1153, %v1181
    %1188 = vrot.lane.b32.xlu0 %v1184, 116
    %v1189 = vpop.permute.xlu0 %1188
    %1190 = vrot.lane.b32.xlu0 %v1185, 116
    %v1191 = vpop.permute.xlu0 %1190
    %v1194 = vadd.f32 %v1174, %v1189
    %v1195 = vadd.f32 %v1175, %v1191
    %1196 = vst.msk [vmem:[#allocation2] sm:$0xff] %vm404, %v1152
    %1197 = vst.msk [vmem:[#allocation2 + $0x8] sm:$0xff] %vm404, %v1153
    %1198 = vst.msk [vmem:[#allocation2] sm:$0xff] %vm407, %v1194
    %1199 = vst.msk [vmem:[#allocation2 + $0x8] sm:$0xff] %vm407, %v1195
    %v1200 = vld [vmem:[#allocation2] sm:$0xff]
    %v1201 = vld [vmem:[#allocation2 + $0x8] sm:$0xff]
    %s1202 = scalar_lea.vmem [#allocation3], 112
    %1203 = vst [vmem:[%s1202] sm:$0xff] %v1200
    %1204 = vst [vmem:[%s1202 + $0x8] sm:$0xff] %v1201
    // Predicated region
    $region22: #{tpu_custom_call.1} parent=1 // pred_check
      _
    $region23: #{tpu_custom_call.1} parent=1 // pred_check_branch
      %1206 = sbr.rel (0) target = $region25
    $region24: #{tpu_custom_call.1} parent=1 // pred_region
      %s1208 = ssub.s32 2048, 2048
      %1209 = vsyncadd [#allocation4], %s1208
      %s1210 = sshll.u32 [#allocation3], 4
      %s1211 = int_to_ptr.vmem [resolvable:$true] %s1210
      %1216 = dma.vmem_to_hbm [thread:$0]  %s1211, 2048, %s5, [#allocation4], 128, 128, 8
    $region25: #{tpu_custom_call.1} parent=1 // pred_fallthru
      _
    // Predicated region
    $region26: #{tpu_custom_call.1} parent=1 // pred_check
      _
    $region27: #{tpu_custom_call.1} parent=1 // pred_check_branch
      %1218 = sbr.rel (0) target = $region29
    $region28: #{tpu_custom_call.1} parent=1 // pred_region
      %1219 = dma.done [#allocation4], 2048
    $region29: #{tpu_custom_call.1} parent=1 // pred_fallthru
      _
    %1220 = vsyncpa [#allocation4], 1

</llo_original>
